<compile_context>
chip_gen: v7x
topology: tpu7x:2x2x1
jax: 0.10.0
libtpu: 0.0.40
codegen_flags: <defaults>
</compile_context>

<pallas_src>
import jax
import jax.numpy as jnp
from jax.experimental import pallas as pl
from jax.experimental.pallas import tpu as pltpu


def _net_kernel(x_ref, w1_ref, b1_ref, w2_ref, b2_ref, wo_ref, bo_ref, out_ref):
    """Batch-on-lanes forward. x_ref: (S, TB) bf16 -> out_ref: (1, TB) f32."""
    # conv1: banded weight folds the K taps of every output position -> 1 MXU matmul.
    y1 = jax.lax.dot_general(
        w1_ref[...], x_ref[...],                      # (L1*C, S) @ (S, TB)
        dimension_numbers=(((1,), (0,)), ((), ())),
        preferred_element_type=jnp.float32)           # (L1*C, TB) f32
    y1 = jnp.maximum(y1 + b1_ref[...], 0.0)           # bias column (L1*C, 1), ReLU

    # conv2: banded over the (position*channel) axis -> 1 MXU matmul, f32 accumulation.
    y2 = jax.lax.dot_general(
        w2_ref[...], y1.astype(jnp.bfloat16),         # (L2*H, L1*C) @ (L1*C, TB)
        dimension_numbers=(((1,), (0,)), ((), ())),
        preferred_element_type=jnp.float32)           # (L2*H, TB) f32
    y2 = jnp.maximum(y2 + b2_ref[...], 0.0)           # bias column (L2*H, 1), ReLU

    # final Linear in f32 on the VPU: column weight broadcast over lanes,
    # sublane reduce -> lane-dense (1, TB) output row.
    out_ref[...] = jnp.sum(y2 * wo_ref[...], axis=0, keepdims=True) + bo_ref[...]


def net_forward(x, params, *, batch_tile=512):
    """x: (B, 1, S) float32 (torch NCW layout). Returns (B, 1) float32."""
    w1, b1, w2, b2, wo, bo = params
    B, _, S = x.shape
    K = 5
    C = w1.shape[0]                     # conv1 out-channels
    H = w2.shape[0]                     # conv2 out-channels (n_hidden)
    L1 = S - (K - 1)                    # conv1 output length (valid conv)
    L2 = L1 - (K - 1)                   # conv2 output length
    f32 = jnp.float32

    # ---------------- wrapper-side weight layout plumbing (tiny, one matmul-free pass) ----
    # conv1 banded weight: W1[m*C + c, s] = w1[c, 0, s - m] if 0 <= s - m < K else 0
    m_idx = jnp.arange(L1)
    s_idx = jnp.arange(S)
    t1 = s_idx[None, :] - m_idx[:, None]                                    # (L1, S)
    v1 = (t1 >= 0) & (t1 < K)
    g1 = jnp.take(w1[:, 0, :].astype(f32), jnp.clip(t1, 0, K - 1), axis=1)  # (C, L1, S)
    w1k = jnp.where(v1[:, None, :], jnp.transpose(g1, (1, 0, 2)), 0.0)
    w1k = w1k.reshape(L1 * C, S).astype(jnp.bfloat16)                       # (L1*C, S)
    b1k = jnp.tile(b1.astype(f32), L1).reshape(L1 * C, 1)                   # (L1*C, 1)

    # conv2 banded weight: W2[l*H + h, m*C + c] = w2[h, c, m - l] if 0 <= m - l < K else 0
    l_idx = jnp.arange(L2)
    t2 = m_idx[None, :] - l_idx[:, None]                                    # (L2, L1)
    v2 = (t2 >= 0) & (t2 < K)
    g2 = jnp.take(w2.astype(f32), jnp.clip(t2, 0, K - 1), axis=2)           # (H, C, L2, L1)
    w2k = jnp.where(v2[:, None, :, None], jnp.transpose(g2, (2, 0, 3, 1)), 0.0)
    w2k = w2k.reshape(L2 * H, L1 * C).astype(jnp.bfloat16)                  # (L2*H, L1*C)
    b2k = jnp.tile(b2.astype(f32), L2).reshape(L2 * H, 1)                   # (L2*H, 1)

    # final Linear: torch flattens (B, H, L2) channel-major (j = h*L2 + l)
    # -> column weight indexed by l*H + h to match the kernel's (L2*H, TB) layout.
    wok = jnp.transpose(wo.reshape(H, L2), (1, 0)).reshape(L2 * H, 1).astype(f32)
    bok = bo.reshape(1, 1).astype(f32)                                      # (1, 1)

    # ---------------- batch-on-lanes input + tiling ----------------
    xT = jnp.transpose(x[:, 0, :], (1, 0)).astype(jnp.bfloat16)             # (S, B)
    if B <= 128:
        TB, Bp = B, B                      # one full-extent tile (demo-sized batches)
    else:
        # >= 2 grid steps (v7x dual-TC sharding), 128-lane-aligned tiles, <= batch_tile.
        TB = min(batch_tile, pl.cdiv(B, 2))
        TB = max(128, (TB // 128) * 128)
        Bp = pl.cdiv(B, TB) * TB
        if Bp != B:
            xT = jnp.pad(xT, ((0, 0), (0, Bp - B)))

    def resident(shape):  # full block, constant index_map -> stays in VMEM across tiles
        return pl.BlockSpec(shape, lambda i: (0,) * len(shape))

    out = pl.pallas_call(
        _net_kernel,
        out_shape=jax.ShapeDtypeStruct((1, Bp), jnp.float32),
        grid=(Bp // TB,),
        in_specs=[
            pl.BlockSpec((S, TB), lambda i: (0, i)),   # x^T tile (pipelined, ~S*TB*2 B)
            resident((L1 * C, S)),        # banded conv1 weight
            resident((L1 * C, 1)),        # conv1 bias column
            resident((L2 * H, L1 * C)),   # banded conv2 weight
            resident((L2 * H, 1)),        # conv2 bias column
            resident((L2 * H, 1)),        # final linear weight column (flatten folded)
            resident((1, 1)),             # final bias
        ],
        out_specs=pl.BlockSpec((1, TB), lambda i: (0, i)),   # lane-dense output row
        compiler_params=pltpu.CompilerParams(
            dimension_semantics=("parallel",)),
    )(xT, w1k, b1k, w2k, b2k, wok, bok)

    return jnp.transpose(out[:, :B], (1, 0))              # (B, 1)


def net_reference(x, params):
    """Pure-JAX (f32) reference mirroring the PyTorch forward exactly."""
    w1, b1, w2, b2, wo, bo = params
    y = jax.lax.conv_general_dilated(
        x, w1, window_strides=(1,), padding='VALID',
        dimension_numbers=('NCH', 'OIH', 'NCH'))
    y = jax.nn.relu(y + b1[None, :, None])
    y = jax.lax.conv_general_dilated(
        y, w2, window_strides=(1,), padding='VALID',
        dimension_numbers=('NCH', 'OIH', 'NCH'))
    y = jax.nn.relu(y + b2[None, :, None])
    y = y.reshape(y.shape[0], -1)          # torch .view(-1, H*(S-8)): channel-major flatten
    return y @ wo.T + bo


def init_params(key, n_states, n_channel=16, n_hidden=64):
    """Deterministic init with torch-default-like uniform(-1/sqrt(fan_in), +)."""
    k = jax.random.split(key, 6)
    K = 5
    L2 = n_states - 8

    def u(key, shape, fan_in):
        bound = 1.0 / jnp.sqrt(fan_in)
        return jax.random.uniform(key, shape, jnp.float32, -bound, bound)

    w1 = u(k[0], (n_channel, 1, K), 1 * K)                 # Conv1d(1, C, 5).weight
    b1 = u(k[1], (n_channel,), 1 * K)                      # Conv1d(1, C, 5).bias
    w2 = u(k[2], (n_hidden, n_channel, K), n_channel * K)  # Conv1d(C, H, 5).weight
    b2 = u(k[3], (n_hidden,), n_channel * K)               # Conv1d(C, H, 5).bias
    wo = u(k[4], (1, n_hidden * L2), n_hidden * L2)        # Linear(H*(S-8), 1).weight
    bo = u(k[5], (1,), n_hidden * L2)                      # Linear(H*(S-8), 1).bias
    return (w1, b1, w2, b2, wo, bo)


if __name__ == "__main__":
    B, S = 2, 16          # batch=2, n_states=16 (torch input (B, 1, n_states))
    n_channel, n_hidden = 16, 64

    key = jax.random.PRNGKey(0)
    kx, kp = jax.random.split(key)
    x = jax.random.normal(kx, (B, 1, S), jnp.float32)
    params = init_params(kp, S, n_channel, n_hidden)

    out = jax.block_until_ready(net_forward(x, params))
    ref = net_reference(x, params)

    assert out.shape == (B, 1), out.shape
    # conv matmuls use bf16 MXU operands with f32 accumulation (final linear is f32):
    # allow a small precision delta vs the pure-f32 reference.
    assert jnp.allclose(out, ref, atol=2e-2, rtol=2e-2), (out, ref)
    print("KERNEL_OK")
</pallas_src>

<mosaic_0001>
module attributes {stable_mosaic.version = 11 : i64} {
  func.func @_net_kernel(%arg0: i32, %arg1: memref<16x2xbf16, #tpu.memory_space<vmem>>, %arg2: memref<192x16xbf16, #tpu.memory_space<vmem>>, %arg3: memref<192x1xf32, #tpu.memory_space<vmem>>, %arg4: memref<512x192xbf16, #tpu.memory_space<vmem>>, %arg5: memref<512x1xf32, #tpu.memory_space<vmem>>, %arg6: memref<512x1xf32, #tpu.memory_space<vmem>>, %arg7: memref<1x1xf32, #tpu.memory_space<vmem>>, %arg8: memref<1x2xf32, #tpu.memory_space<vmem>>) attributes {dimension_semantics = [#tpu.dimension_semantics<parallel>], iteration_bounds = array<i64: 1>, scalar_prefetch = 0 : i64, scratch_operands = 0 : i64, tpu.core_type = #tpu.core_type<tc>, window_params = [{transform_indices = @transform_0, window_bounds = array<i64: 16, 2>}, {pipeline_mode = #tpu.pipeline_mode<synchronous>, transform_indices = @transform_1, window_bounds = array<i64: 192, 16>}, {pipeline_mode = #tpu.pipeline_mode<synchronous>, transform_indices = @transform_2, window_bounds = array<i64: 192, 1>}, {pipeline_mode = #tpu.pipeline_mode<synchronous>, transform_indices = @transform_3, window_bounds = array<i64: 512, 192>}, {pipeline_mode = #tpu.pipeline_mode<synchronous>, transform_indices = @transform_4, window_bounds = array<i64: 512, 1>}, {pipeline_mode = #tpu.pipeline_mode<synchronous>, transform_indices = @transform_5, window_bounds = array<i64: 512, 1>}, {pipeline_mode = #tpu.pipeline_mode<synchronous>, transform_indices = @transform_6, window_bounds = array<i64: 1, 1>}, {transform_indices = @transform_7, window_bounds = array<i64: 1, 2>}]} {
    %c0 = arith.constant 0 : index
    %c0_0 = arith.constant 0 : index
    %0 = vector.load %arg2[%c0, %c0_0] : memref<192x16xbf16, #tpu.memory_space<vmem>>, vector<192x16xbf16>
    %c0_1 = arith.constant 0 : index
    %c0_2 = arith.constant 0 : index
    %1 = vector.load %arg1[%c0_1, %c0_2] : memref<16x2xbf16, #tpu.memory_space<vmem>>, vector<16x2xbf16>
    %cst = arith.constant dense<0.000000e+00> : vector<192x2xf32>
    %2 = tpu.matmul %0, %1, %cst {dimension_numbers = #tpu.dot_dimension_numbers<[1], [0], [0], [1], [0, 0, 1, 1], [], []>} : vector<192x16xbf16>, vector<16x2xbf16>, vector<192x2xf32> -> vector<192x2xf32>
    %c0_3 = arith.constant 0 : index
    %c0_4 = arith.constant 0 : index
    %3 = vector.load %arg3[%c0_3, %c0_4] : memref<192x1xf32, #tpu.memory_space<vmem>>, vector<192x1xf32>
    %4 = vector.broadcast %3 : vector<192x1xf32> to vector<192x2xf32>
    %5 = arith.addf %2, %4 : vector<192x2xf32>
    %cst_5 = arith.constant 0.000000e+00 : f32
    %6 = vector.broadcast %cst_5 : f32 to vector<192x2xf32>
    %7 = arith.maximumf %5, %6 : vector<192x2xf32>
    %c0_6 = arith.constant 0 : index
    %c0_7 = arith.constant 0 : index
    %8 = vector.load %arg4[%c0_6, %c0_7] : memref<512x192xbf16, #tpu.memory_space<vmem>>, vector<512x192xbf16>
    %9 = arith.truncf %7 : vector<192x2xf32> to vector<192x2xbf16>
    %cst_8 = arith.constant dense<0.000000e+00> : vector<512x2xf32>
    %10 = tpu.matmul %8, %9, %cst_8 {dimension_numbers = #tpu.dot_dimension_numbers<[1], [0], [0], [1], [0, 0, 1, 1], [], []>} : vector<512x192xbf16>, vector<192x2xbf16>, vector<512x2xf32> -> vector<512x2xf32>
    %c0_9 = arith.constant 0 : index
    %c0_10 = arith.constant 0 : index
    %11 = vector.load %arg5[%c0_9, %c0_10] : memref<512x1xf32, #tpu.memory_space<vmem>>, vector<512x1xf32>
    %12 = vector.broadcast %11 : vector<512x1xf32> to vector<512x2xf32>
    %13 = arith.addf %10, %12 : vector<512x2xf32>
    %cst_11 = arith.constant 0.000000e+00 : f32
    %14 = vector.broadcast %cst_11 : f32 to vector<512x2xf32>
    %15 = arith.maximumf %13, %14 : vector<512x2xf32>
    %c0_12 = arith.constant 0 : index
    %c0_13 = arith.constant 0 : index
    %16 = vector.load %arg6[%c0_12, %c0_13] : memref<512x1xf32, #tpu.memory_space<vmem>>, vector<512x1xf32>
    %17 = vector.broadcast %16 : vector<512x1xf32> to vector<512x2xf32>
    %18 = arith.mulf %15, %17 : vector<512x2xf32>
    %cst_14 = arith.constant dense<0.000000e+00> : vector<2xf32>
    %19 = vector.multi_reduction <add>, %18, %cst_14 [0] : vector<512x2xf32> to vector<2xf32>
    %20 = vector.shape_cast %19 : vector<2xf32> to vector<1x2xf32>
    %c0_15 = arith.constant 0 : index
    %c0_16 = arith.constant 0 : index
    %21 = vector.load %arg7[%c0_15, %c0_16] : memref<1x1xf32, #tpu.memory_space<vmem>>, vector<1x1xf32>
    %22 = vector.broadcast %21 : vector<1x1xf32> to vector<1x2xf32>
    %23 = arith.addf %20, %22 : vector<1x2xf32>
    %c0_17 = arith.constant 0 : index
    %c0_18 = arith.constant 0 : index
    %24 = vector.load %arg8[%c0_17, %c0_18] : memref<1x2xf32, #tpu.memory_space<vmem>>, vector<1x2xf32>
    tpu.vector_store %arg8[%c0_17, %c0_18], %23 {strides = array<i32>} : memref<1x2xf32, #tpu.memory_space<vmem>>, vector<1x2xf32>,
    return
  }
  func.func @transform_0(%arg0: i32) -> (i32, i32) {
    %c0_i32 = arith.constant 0 : i32
    %c0_i32_0 = arith.constant 0 : i32
    return %c0_i32, %arg0 : i32, i32
  }
  func.func @transform_1(%arg0: i32) -> (i32, i32) {
    %c0_i32 = arith.constant 0 : i32
    %c0_i32_0 = arith.constant 0 : i32
    %c0_i32_1 = arith.constant 0 : i32
    return %c0_i32, %c0_i32_0 : i32, i32
  }
  func.func @transform_2(%arg0: i32) -> (i32, i32) {
    %c0_i32 = arith.constant 0 : i32
    %c0_i32_0 = arith.constant 0 : i32
    %c0_i32_1 = arith.constant 0 : i32
    return %c0_i32, %c0_i32_0 : i32, i32
  }
  func.func @transform_3(%arg0: i32) -> (i32, i32) {
    %c0_i32 = arith.constant 0 : i32
    %c0_i32_0 = arith.constant 0 : i32
    %c0_i32_1 = arith.constant 0 : i32
    return %c0_i32, %c0_i32_0 : i32, i32
  }
  func.func @transform_4(%arg0: i32) -> (i32, i32) {
    %c0_i32 = arith.constant 0 : i32
    %c0_i32_0 = arith.constant 0 : i32
    %c0_i32_1 = arith.constant 0 : i32
    return %c0_i32, %c0_i32_0 : i32, i32
  }
  func.func @transform_5(%arg0: i32) -> (i32, i32) {
    %c0_i32 = arith.constant 0 : i32
    %c0_i32_0 = arith.constant 0 : i32
    %c0_i32_1 = arith.constant 0 : i32
    return %c0_i32, %c0_i32_0 : i32, i32
  }
  func.func @transform_6(%arg0: i32) -> (i32, i32) {
    %c0_i32 = arith.constant 0 : i32
    %c0_i32_0 = arith.constant 0 : i32
    %c0_i32_1 = arith.constant 0 : i32
    return %c0_i32, %c0_i32_0 : i32, i32
  }
  func.func @transform_7(%arg0: i32) -> (i32, i32) {
    %c0_i32 = arith.constant 0 : i32
    %c0_i32_0 = arith.constant 0 : i32
    return %c0_i32, %arg0 : i32, i32
  }
}

</mosaic_0001>

<llo_original>
// kernel: tpu_custom_call.1
$region0: #{tpu_custom_call.1}
  #allocation0 [shape = 'u32[]', space=smem, size = 0x4, offset = 0x4, fixed_abs, tag = 'smem constant byte address 0x4 - core index']
  #allocation1 [shape = 'u32[144,128]{1,0:T(1,128)}', space=vmem, size = 0x12000, scoped, tag = 'internal scratch']
  #allocation2 [shape = 'f32[1,1]{1,0:T(1,128)S(1)}', space=vmem, size = 0x200, scoped, tag = 'scoped memory for tpu_custom_call.1']
  %s0 = inlined_call_operand.vmem [shape: bf16[16,2], index: 0, kind: input, shape index: {}]
  %s1 = inlined_call_operand.vmem [shape: bf16[192,16], index: 1, kind: input, shape index: {}]
  %s2 = inlined_call_operand.vmem [shape: f32[192,1], index: 2, kind: input, shape index: {}]
  %s3 = inlined_call_operand.vmem [shape: bf16[512,192], index: 3, kind: input, shape index: {}]
  %s4 = inlined_call_operand.vmem [shape: f32[512,1], index: 4, kind: input, shape index: {}]
  %s5 = inlined_call_operand.vmem [shape: f32[512,1], index: 5, kind: input, shape index: {}]
  %s6 = inlined_call_operand.<no memory space> [shape: f32[1,1], index: 6, kind: input, shape index: {}]
  %s7 = inlined_call_operand.hbm [shape: f32[1,2], index: 7, kind: output, shape index: {}]
  %s8 = sld [smem:[#allocation0]]
  $region38: #{tpu_custom_call.1} parent=0
    _
  %s10 = ssub.s32 1, %s8
  %s11 = scalar_select 0, %s10, %s8
  %v12 = vstv %s6
  %13 = vst [vmem:[#allocation2] sm:$0x1] %v12
  $region1: #{tpu_custom_call.1} parent=0
    #allocation3 [shape = 'u8[512]{0}', space=vmem, size = 0x400, scoped, tag = 'output window, operand 0, single buffered']
    #allocation4 [shape = 's32[1]{0}', space=sflag, size = 0x4, scoped, tag = 'scoped memory for tpu_custom_call.1']
    %14 = vsyncpa [#allocation4], 0
    // Predicated region
    $region2: #{tpu_custom_call.1} parent=1 // pred_check
      _
    $region3: #{tpu_custom_call.1} parent=1 // pred_check_branch
      %16 = sbr.rel (0) target = $region5
    $region4: #{tpu_custom_call.1} parent=1 // pred_region
      _
    $region5: #{tpu_custom_call.1} parent=1 // pred_fallthru
      _
    // Predicated region
    $region6: #{tpu_custom_call.1} parent=1 // pred_check
      _
    $region7: #{tpu_custom_call.1} parent=1 // pred_check_branch
      %18 = sbr.rel (0) target = $region9
    $region8: #{tpu_custom_call.1} parent=1 // pred_region
      _
    $region9: #{tpu_custom_call.1} parent=1 // pred_fallthru
      _
    // Predicated region
    $region10: #{tpu_custom_call.1} parent=1 // pred_check
      _
    $region11: #{tpu_custom_call.1} parent=1 // pred_check_branch
      %20 = sbr.rel (0) target = $region13
    $region12: #{tpu_custom_call.1} parent=1 // pred_region
      _
    $region13: #{tpu_custom_call.1} parent=1 // pred_fallthru
      _
    // Predicated region
    $region14: #{tpu_custom_call.1} parent=1 // pred_check
      _
    $region15: #{tpu_custom_call.1} parent=1 // pred_check_branch
      %22 = sbr.rel (0) target = $region17
    $region16: #{tpu_custom_call.1} parent=1 // pred_region
      _
    $region17: #{tpu_custom_call.1} parent=1 // pred_fallthru
      _
    // Predicated region
    $region18: #{tpu_custom_call.1} parent=1 // pred_check
      _
    $region19: #{tpu_custom_call.1} parent=1 // pred_check_branch
      %24 = sbr.rel (0) target = $region21
    $region20: #{tpu_custom_call.1} parent=1 // pred_region
      _
    $region21: #{tpu_custom_call.1} parent=1 // pred_fallthru
      _
    // Predicated region
    $region22: #{tpu_custom_call.1} parent=1 // pred_check
      _
    $region23: #{tpu_custom_call.1} parent=1 // pred_check_branch
      %26 = sbr.rel (0) target = $region25
    $region24: #{tpu_custom_call.1} parent=1 // pred_region
      _
    $region25: #{tpu_custom_call.1} parent=1 // pred_fallthru
      _
    // Predicated region
    $region26: #{tpu_custom_call.1} parent=1 // pred_check
      _
    $region27: #{tpu_custom_call.1} parent=1 // pred_check_branch
      %28 = sbr.rel (0) target = $region29
    $region28: #{tpu_custom_call.1} parent=1 // pred_region
      _
    $region29: #{tpu_custom_call.1} parent=1 // pred_fallthru
      _
    %v30 = vld [vmem:[%s1] sm:$0xf]
    %v31 = vld [vmem:[%s1 + $0x4] sm:$0xf]
    %v32 = vld [vmem:[%s1 + $0x8] sm:$0xf]
    %v33 = vld [vmem:[%s1 + $0xc] sm:$0xf]
    %v34 = vld [vmem:[%s1 + $0x10] sm:$0xf]
    %v35 = vld [vmem:[%s1 + $0x14] sm:$0xf]
    %v36 = vld [vmem:[%s1 + $0x18] sm:$0xf]
    %v37 = vld [vmem:[%s1 + $0x1c] sm:$0xf]
    %v38 = vld [vmem:[%s1 + $0x20] sm:$0xf]
    %v39 = vld [vmem:[%s1 + $0x24] sm:$0xf]
    %v40 = vld [vmem:[%s1 + $0x28] sm:$0xf]
    %v41 = vld [vmem:[%s1 + $0x2c] sm:$0xf]
    %v42 = vld [vmem:[%s1 + $0x30] sm:$0xf]
    %v43 = vld [vmem:[%s1 + $0x34] sm:$0xf]
    %v44 = vld [vmem:[%s1 + $0x38] sm:$0xf]
    %v45 = vld [vmem:[%s1 + $0x3c] sm:$0xf]
    %v46 = vld [vmem:[%s1 + $0x40] sm:$0xf]
    %v47 = vld [vmem:[%s1 + $0x44] sm:$0xf]
    %v48 = vld [vmem:[%s1 + $0x48] sm:$0xf]
    %v49 = vld [vmem:[%s1 + $0x4c] sm:$0xf]
    %v50 = vld [vmem:[%s1 + $0x50] sm:$0xf]
    %v51 = vld [vmem:[%s1 + $0x54] sm:$0xf]
    %v52 = vld [vmem:[%s1 + $0x58] sm:$0xf]
    %v53 = vld [vmem:[%s1 + $0x5c] sm:$0xf]
    %v54 = vld [vmem:[%s0] sm:$0xf]
    %v55 = vld [vmem:[%s0 + $0x4] sm:$0xf]
    %v56 = vld [vmem:[%s2] sm:$0xff]
    %v57 = vld [vmem:[%s2 + $0x8] sm:$0xff]
    %v58 = vld [vmem:[%s2 + $0x10] sm:$0xff]
    %v59 = vld [vmem:[%s2 + $0x18] sm:$0xff]
    %v60 = vld [vmem:[%s2 + $0x20] sm:$0xff]
    %v61 = vld [vmem:[%s2 + $0x28] sm:$0xff]
    %v62 = vld [vmem:[%s2 + $0x30] sm:$0xff]
    %v63 = vld [vmem:[%s2 + $0x38] sm:$0xff]
    %v64 = vld [vmem:[%s2 + $0x40] sm:$0xff]
    %v65 = vld [vmem:[%s2 + $0x48] sm:$0xff]
    %v66 = vld [vmem:[%s2 + $0x50] sm:$0xff]
    %v67 = vld [vmem:[%s2 + $0x58] sm:$0xff]
    %v68 = vld [vmem:[%s2 + $0x60] sm:$0xff]
    %v69 = vld [vmem:[%s2 + $0x68] sm:$0xff]
    %v70 = vld [vmem:[%s2 + $0x70] sm:$0xff]
    %v71 = vld [vmem:[%s2 + $0x78] sm:$0xff]
    %v72 = vld [vmem:[%s2 + $0x80] sm:$0xff]
    %v73 = vld [vmem:[%s2 + $0x88] sm:$0xff]
    %v74 = vld [vmem:[%s2 + $0x90] sm:$0xff]
    %v75 = vld [vmem:[%s2 + $0x98] sm:$0xff]
    %v76 = vld [vmem:[%s2 + $0xa0] sm:$0xff]
    %v77 = vld [vmem:[%s2 + $0xa8] sm:$0xff]
    %v78 = vld [vmem:[%s2 + $0xb0] sm:$0xff]
    %v79 = vld [vmem:[%s2 + $0xb8] sm:$0xff]
    %81 = vset.pattern.permute.xlu0 0
    %82 = vperm.xlu0 %81, %v56
    %v83 = vpop.permute.xlu0 %82
    %86 = vset.pattern.permute.xlu0 0
    %87 = vperm.xlu0 %86, %v57
    %v88 = vpop.permute.xlu0 %87
    %91 = vset.pattern.permute.xlu0 0
    %92 = vperm.xlu0 %91, %v58
    %v93 = vpop.permute.xlu0 %92
    %96 = vset.pattern.permute.xlu0 0
    %97 = vperm.xlu0 %96, %v59
    %v98 = vpop.permute.xlu0 %97
    %101 = vset.pattern.permute.xlu0 0
    %102 = vperm.xlu0 %101, %v60
    %v103 = vpop.permute.xlu0 %102
    %106 = vset.pattern.permute.xlu0 0
    %107 = vperm.xlu0 %106, %v61
    %v108 = vpop.permute.xlu0 %107
    %111 = vset.pattern.permute.xlu0 0
    %112 = vperm.xlu0 %111, %v62
    %v113 = vpop.permute.xlu0 %112
    %116 = vset.pattern.permute.xlu0 0
    %117 = vperm.xlu0 %116, %v63
    %v118 = vpop.permute.xlu0 %117
    %121 = vset.pattern.permute.xlu0 0
    %122 = vperm.xlu0 %121, %v64
    %v123 = vpop.permute.xlu0 %122
    %126 = vset.pattern.permute.xlu0 0
    %127 = vperm.xlu0 %126, %v65
    %v128 = vpop.permute.xlu0 %127
    %131 = vset.pattern.permute.xlu0 0
    %132 = vperm.xlu0 %131, %v66
    %v133 = vpop.permute.xlu0 %132
    %136 = vset.pattern.permute.xlu0 0
    %137 = vperm.xlu0 %136, %v67
    %v138 = vpop.permute.xlu0 %137
    %141 = vset.pattern.permute.xlu0 0
    %142 = vperm.xlu0 %141, %v68
    %v143 = vpop.permute.xlu0 %142
    %146 = vset.pattern.permute.xlu0 0
    %147 = vperm.xlu0 %146, %v69
    %v148 = vpop.permute.xlu0 %147
    %151 = vset.pattern.permute.xlu0 0
    %152 = vperm.xlu0 %151, %v70
    %v153 = vpop.permute.xlu0 %152
    %156 = vset.pattern.permute.xlu0 0
    %157 = vperm.xlu0 %156, %v71
    %v158 = vpop.permute.xlu0 %157
    %161 = vset.pattern.permute.xlu0 0
    %162 = vperm.xlu0 %161, %v72
    %v163 = vpop.permute.xlu0 %162
    %166 = vset.pattern.permute.xlu0 0
    %167 = vperm.xlu0 %166, %v73
    %v168 = vpop.permute.xlu0 %167
    %171 = vset.pattern.permute.xlu0 0
    %172 = vperm.xlu0 %171, %v74
    %v173 = vpop.permute.xlu0 %172
    %176 = vset.pattern.permute.xlu0 0
    %177 = vperm.xlu0 %176, %v75
    %v178 = vpop.permute.xlu0 %177
    %181 = vset.pattern.permute.xlu0 0
    %182 = vperm.xlu0 %181, %v76
    %v183 = vpop.permute.xlu0 %182
    %186 = vset.pattern.permute.xlu0 0
    %187 = vperm.xlu0 %186, %v77
    %v188 = vpop.permute.xlu0 %187
    %191 = vset.pattern.permute.xlu0 0
    %192 = vperm.xlu0 %191, %v78
    %v193 = vpop.permute.xlu0 %192
    %196 = vset.pattern.permute.xlu0 0
    %197 = vperm.xlu0 %196, %v79
    %v198 = vpop.permute.xlu0 %197
    %v224 = vunpack.c.l.b16 %v30
    %v225 = vunpack.c.l.b16 %v31
    %v226 = vunpack.c.l.b16 %v32
    %v227 = vunpack.c.l.b16 %v33
    %v228 = vunpack.c.l.b16 %v34
    %v229 = vunpack.c.l.b16 %v35
    %v230 = vunpack.c.l.b16 %v36
    %v231 = vunpack.c.l.b16 %v37
    %v232 = vunpack.c.l.b16 %v38
    %v233 = vunpack.c.l.b16 %v39
    %v234 = vunpack.c.l.b16 %v40
    %v235 = vunpack.c.l.b16 %v41
    %v236 = vunpack.c.l.b16 %v42
    %v237 = vunpack.c.l.b16 %v43
    %v238 = vunpack.c.l.b16 %v44
    %v239 = vunpack.c.l.b16 %v45
    %v240 = vunpack.c.l.b16 %v46
    %v241 = vunpack.c.l.b16 %v47
    %v242 = vunpack.c.l.b16 %v48
    %v243 = vunpack.c.l.b16 %v49
    %v244 = vunpack.c.l.b16 %v50
    %v245 = vunpack.c.l.b16 %v51
    %v246 = vunpack.c.l.b16 %v52
    %v247 = vunpack.c.l.b16 %v53
    %v248 = vpack.c.b16 %v225, %v224
    %v249 = vpack.c.b16 %v227, %v226
    %v250 = vpack.c.b16 %v229, %v228
    %v251 = vpack.c.b16 %v231, %v230
    %v252 = vpack.c.b16 %v233, %v232
    %v253 = vpack.c.b16 %v235, %v234
    %v254 = vpack.c.b16 %v237, %v236
    %v255 = vpack.c.b16 %v239, %v238
    %v256 = vpack.c.b16 %v241, %v240
    %v257 = vpack.c.b16 %v243, %v242
    %v258 = vpack.c.b16 %v245, %v244
    %v259 = vpack.c.b16 %v247, %v246
    %v262 = vunpack.c.l.b16 %v54
    %v263 = vunpack.c.l.b16 %v55
    %v264 = vpack.c.b16 %v263, %v262
    %vm266 = vcmask 130048
    %v268 = vsel %vm266, %v248, 0
    %v271 = vsel %vm266, %v249, 0
    %v274 = vsel %vm266, %v250, 0
    %v277 = vsel %vm266, %v251, 0
    %v280 = vsel %vm266, %v252, 0
    %v283 = vsel %vm266, %v253, 0
    %v286 = vsel %vm266, %v254, 0
    %v289 = vsel %vm266, %v255, 0
    %v292 = vsel %vm266, %v256, 0
    %v295 = vsel %vm266, %v257, 0
    %v298 = vsel %vm266, %v258, 0
    %v301 = vsel %vm266, %v259, 0
    %303 = vmatprep.subr.bf16.mxu0 0
    %304 = vmatpush1.bf16.msra.mxu0 %v264
    %305 = vmatprep.subr.bf16.mxu0 0
    %306 = vmatpush1.bf16.msra.mxu0 0
    %307 = vmatprep.subr.bf16.mxu0 0
    %308 = vmatpush1.bf16.msra.mxu0 0
    %309 = vmatprep.subr.bf16.mxu0 0
    %310 = vmatpush1.bf16.msra.mxu0 0
    %311 = vmatprep.subr.bf16.mxu0 0
    %312 = vmatpush1.bf16.msra.mxu0 0
    %313 = vmatprep.subr.bf16.mxu0 0
    %314 = vmatpush1.bf16.msra.mxu0 0
    %315 = vmatprep.subr.bf16.mxu0 0
    %316 = vmatpush1.bf16.msra.mxu0 0
    %317 = vmatprep.subr.bf16.mxu0 0
    %318 = vmatpush1.bf16.msra.mxu0 0
    %319 = vmatprep.subr.bf16.mxu0 0
    %320 = vmatpush1.bf16.msra.mxu0 0
    %321 = vmatprep.subr.bf16.mxu0 0
    %322 = vmatpush1.bf16.msra.mxu0 0
    %323 = vmatprep.subr.bf16.mxu0 0
    %324 = vmatpush1.bf16.msra.mxu0 0
    %325 = vmatprep.subr.bf16.mxu0 0
    %326 = vmatpush1.bf16.msra.mxu0 0
    %327 = vmatprep.subr.bf16.mxu0 0
    %328 = vmatpush1.bf16.msra.mxu0 0
    %329 = vmatprep.subr.bf16.mxu0 0
    %330 = vmatpush1.bf16.msra.mxu0 0
    %331 = vmatprep.subr.bf16.mxu0 0
    %332 = vmatpush1.bf16.msra.mxu0 0
    %333 = vmatprep.subr.bf16.mxu0 0
    %334 = vmatpush1.bf16.msra.mxu0 0
    %335 = vmatprep.mubr.bf16.mxu0 0
    %336 = vmatmul.mubr.bf16.gmra.mrb[0].mxu0 %v268
    %v337 = vpop.f32.mrb[0].mxu0
    %v338 = vadd.f32 %v83, %v337
    %v339 = vpop.f32.mrb[0].mxu0
    %v340 = vpop.f32.mrb[0].mxu0
    %v341 = vadd.f32 %v88, %v340
    %v342 = vpop.f32.mrb[0].mxu0
    %343 = vmatprep.mubr.bf16.mxu0 0
    %344 = vmatmul.mubr.bf16.gmra.mrb[0].mxu0 %v271
    %v345 = vpop.f32.mrb[0].mxu0
    %v346 = vadd.f32 %v93, %v345
    %v347 = vpop.f32.mrb[0].mxu0
    %v348 = vpop.f32.mrb[0].mxu0
    %v349 = vadd.f32 %v98, %v348
    %v350 = vpop.f32.mrb[0].mxu0
    %351 = vmatprep.mubr.bf16.mxu0 0
    %352 = vmatmul.mubr.bf16.gmra.mrb[0].mxu0 %v274
    %v353 = vpop.f32.mrb[0].mxu0
    %v354 = vadd.f32 %v103, %v353
    %v355 = vpop.f32.mrb[0].mxu0
    %v356 = vpop.f32.mrb[0].mxu0
    %v357 = vadd.f32 %v108, %v356
    %v358 = vpop.f32.mrb[0].mxu0
    %359 = vmatprep.mubr.bf16.mxu0 0
    %360 = vmatmul.mubr.bf16.gmra.mrb[0].mxu0 %v277
    %v361 = vpop.f32.mrb[0].mxu0
    %v362 = vadd.f32 %v113, %v361
    %v363 = vpop.f32.mrb[0].mxu0
    %v364 = vpop.f32.mrb[0].mxu0
    %v365 = vadd.f32 %v118, %v364
    %v366 = vpop.f32.mrb[0].mxu0
    %367 = vmatprep.mubr.bf16.mxu0 0
    %368 = vmatmul.mubr.bf16.gmra.mrb[0].mxu0 %v280
    %v369 = vpop.f32.mrb[0].mxu0
    %v370 = vadd.f32 %v123, %v369
    %v371 = vpop.f32.mrb[0].mxu0
    %v372 = vpop.f32.mrb[0].mxu0
    %v373 = vadd.f32 %v128, %v372
    %v374 = vpop.f32.mrb[0].mxu0
    %375 = vmatprep.mubr.bf16.mxu0 0
    %376 = vmatmul.mubr.bf16.gmra.mrb[0].mxu0 %v283
    %v377 = vpop.f32.mrb[0].mxu0
    %v378 = vadd.f32 %v133, %v377
    %v379 = vpop.f32.mrb[0].mxu0
    %v380 = vpop.f32.mrb[0].mxu0
    %v381 = vadd.f32 %v138, %v380
    %v382 = vpop.f32.mrb[0].mxu0
    %383 = vmatprep.mubr.bf16.mxu0 0
    %384 = vmatmul.mubr.bf16.gmra.mrb[0].mxu0 %v286
    %v385 = vpop.f32.mrb[0].mxu0
    %v386 = vadd.f32 %v143, %v385
    %v387 = vpop.f32.mrb[0].mxu0
    %v388 = vpop.f32.mrb[0].mxu0
    %v389 = vadd.f32 %v148, %v388
    %v390 = vpop.f32.mrb[0].mxu0
    %391 = vmatprep.mubr.bf16.mxu0 0
    %392 = vmatmul.mubr.bf16.gmra.mrb[0].mxu0 %v289
    %v393 = vpop.f32.mrb[0].mxu0
    %v394 = vadd.f32 %v153, %v393
    %v395 = vpop.f32.mrb[0].mxu0
    %v396 = vpop.f32.mrb[0].mxu0
    %v397 = vadd.f32 %v158, %v396
    %v398 = vpop.f32.mrb[0].mxu0
    %399 = vmatprep.mubr.bf16.mxu0 0
    %400 = vmatmul.mubr.bf16.gmra.mrb[0].mxu0 %v292
    %v401 = vpop.f32.mrb[0].mxu0
    %v402 = vadd.f32 %v163, %v401
    %v403 = vpop.f32.mrb[0].mxu0
    %v404 = vpop.f32.mrb[0].mxu0
    %v405 = vadd.f32 %v168, %v404
    %v406 = vpop.f32.mrb[0].mxu0
    %407 = vmatprep.mubr.bf16.mxu0 0
    %408 = vmatmul.mubr.bf16.gmra.mrb[0].mxu0 %v295
    %v409 = vpop.f32.mrb[0].mxu0
    %v410 = vadd.f32 %v173, %v409
    %v411 = vpop.f32.mrb[0].mxu0
    %v412 = vpop.f32.mrb[0].mxu0
    %v413 = vadd.f32 %v178, %v412
    %v414 = vpop.f32.mrb[0].mxu0
    %415 = vmatprep.mubr.bf16.mxu0 0
    %416 = vmatmul.mubr.bf16.gmra.mrb[0].mxu0 %v298
    %v417 = vpop.f32.mrb[0].mxu0
    %v418 = vadd.f32 %v183, %v417
    %v419 = vpop.f32.mrb[0].mxu0
    %v420 = vpop.f32.mrb[0].mxu0
    %v421 = vadd.f32 %v188, %v420
    %v422 = vpop.f32.mrb[0].mxu0
    %423 = vmatprep.mubr.bf16.mxu0 0
    %424 = vmatmul.mubr.bf16.gmra.mrb[0].mxu0 %v301
    %v425 = vpop.f32.mrb[0].mxu0
    %v426 = vadd.f32 %v193, %v425
    %v427 = vpop.f32.mrb[0].mxu0
    %v428 = vpop.f32.mrb[0].mxu0
    %v429 = vadd.f32 %v198, %v428
    %v430 = vpop.f32.mrb[0].mxu0
    %431 = vdwg.mxu0
    %v432 = vmax.f32 %v338, 0.0
    %v433 = vmax.f32 %v341, 0.0
    %v434 = vmax.f32 %v346, 0.0
    %v435 = vmax.f32 %v349, 0.0
    %v436 = vmax.f32 %v354, 0.0
    %v437 = vmax.f32 %v357, 0.0
    %v438 = vmax.f32 %v362, 0.0
    %v439 = vmax.f32 %v365, 0.0
    %v440 = vmax.f32 %v370, 0.0
    %v441 = vmax.f32 %v373, 0.0
    %v442 = vmax.f32 %v378, 0.0
    %v443 = vmax.f32 %v381, 0.0
    %v444 = vmax.f32 %v386, 0.0
    %v445 = vmax.f32 %v389, 0.0
    %v446 = vmax.f32 %v394, 0.0
    %v447 = vmax.f32 %v397, 0.0
    %v448 = vmax.f32 %v402, 0.0
    %v449 = vmax.f32 %v405, 0.0
    %v450 = vmax.f32 %v410, 0.0
    %v451 = vmax.f32 %v413, 0.0
    %v452 = vmax.f32 %v418, 0.0
    %v453 = vmax.f32 %v421, 0.0
    %v454 = vmax.f32 %v426, 0.0
    %v455 = vmax.f32 %v429, 0.0
    %v456 = vld [vmem:[%s3] sm:$0xff]
    %v457 = vld [vmem:[%s3 + $0x8] sm:$0xff]
    %v458 = vld [vmem:[%s3 + $0x10] sm:$0xff]
    %v459 = vld [vmem:[%s3 + $0x18] sm:$0xff]
    %v460 = vld [vmem:[%s3 + $0x20] sm:$0xff]
    %v461 = vld [vmem:[%s3 + $0x28] sm:$0xff]
    %v462 = vld [vmem:[%s3 + $0x30] sm:$0xff]
    %v463 = vld [vmem:[%s3 + $0x38] sm:$0xff]
    %v464 = vld [vmem:[%s3 + $0x40] sm:$0xff]
    %v465 = vld [vmem:[%s3 + $0x48] sm:$0xff]
    %v466 = vld [vmem:[%s3 + $0x50] sm:$0xff]
    %v467 = vld [vmem:[%s3 + $0x58] sm:$0xff]
    %v468 = vld [vmem:[%s3 + $0x60] sm:$0xff]
    %v469 = vld [vmem:[%s3 + $0x68] sm:$0xff]
    %v470 = vld [vmem:[%s3 + $0x70] sm:$0xff]
    %v471 = vld [vmem:[%s3 + $0x78] sm:$0xff]
    %v472 = vld [vmem:[%s3 + $0x80] sm:$0xff]
    %v473 = vld [vmem:[%s3 + $0x88] sm:$0xff]
    %v474 = vld [vmem:[%s3 + $0x90] sm:$0xff]
    %v475 = vld [vmem:[%s3 + $0x98] sm:$0xff]
    %v476 = vld [vmem:[%s3 + $0xa0] sm:$0xff]
    %v477 = vld [vmem:[%s3 + $0xa8] sm:$0xff]
    %v478 = vld [vmem:[%s3 + $0xb0] sm:$0xff]
    %v479 = vld [vmem:[%s3 + $0xb8] sm:$0xff]
    %v480 = vld [vmem:[%s3 + $0xc0] sm:$0xff]
    %v481 = vld [vmem:[%s3 + $0xc8] sm:$0xff]
    %v482 = vld [vmem:[%s3 + $0xd0] sm:$0xff]
    %v483 = vld [vmem:[%s3 + $0xd8] sm:$0xff]
    %v484 = vld [vmem:[%s3 + $0xe0] sm:$0xff]
    %v485 = vld [vmem:[%s3 + $0xe8] sm:$0xff]
    %v486 = vld [vmem:[%s3 + $0xf0] sm:$0xff]
    %v487 = vld [vmem:[%s3 + $0xf8] sm:$0xff]
    %v488 = vld [vmem:[%s3 + $0x100] sm:$0xff]
    %v489 = vld [vmem:[%s3 + $0x108] sm:$0xff]
    %v490 = vld [vmem:[%s3 + $0x110] sm:$0xff]
    %v491 = vld [vmem:[%s3 + $0x118] sm:$0xff]
    %v492 = vld [vmem:[%s3 + $0x120] sm:$0xff]
    %v493 = vld [vmem:[%s3 + $0x128] sm:$0xff]
    %v494 = vld [vmem:[%s3 + $0x130] sm:$0xff]
    %v495 = vld [vmem:[%s3 + $0x138] sm:$0xff]
    %v496 = vld [vmem:[%s3 + $0x140] sm:$0xff]
    %v497 = vld [vmem:[%s3 + $0x148] sm:$0xff]
    %v498 = vld [vmem:[%s3 + $0x150] sm:$0xff]
    %v499 = vld [vmem:[%s3 + $0x158] sm:$0xff]
    %v500 = vld [vmem:[%s3 + $0x160] sm:$0xff]
    %v501 = vld [vmem:[%s3 + $0x168] sm:$0xff]
    %v502 = vld [vmem:[%s3 + $0x170] sm:$0xff]
    %v503 = vld [vmem:[%s3 + $0x178] sm:$0xff]
    %v504 = vld [vmem:[%s3 + $0x180] sm:$0xff]
    %v505 = vld [vmem:[%s3 + $0x188] sm:$0xff]
    %v506 = vld [vmem:[%s3 + $0x190] sm:$0xff]
    %v507 = vld [vmem:[%s3 + $0x198] sm:$0xff]
    %v508 = vld [vmem:[%s3 + $0x1a0] sm:$0xff]
    %v509 = vld [vmem:[%s3 + $0x1a8] sm:$0xff]
    %v510 = vld [vmem:[%s3 + $0x1b0] sm:$0xff]
    %v511 = vld [vmem:[%s3 + $0x1b8] sm:$0xff]
    %v512 = vld [vmem:[%s3 + $0x1c0] sm:$0xff]
    %v513 = vld [vmem:[%s3 + $0x1c8] sm:$0xff]
    %v514 = vld [vmem:[%s3 + $0x1d0] sm:$0xff]
    %v515 = vld [vmem:[%s3 + $0x1d8] sm:$0xff]
    %v516 = vld [vmem:[%s3 + $0x1e0] sm:$0xff]
    %v517 = vld [vmem:[%s3 + $0x1e8] sm:$0xff]
    %v518 = vld [vmem:[%s3 + $0x1f0] sm:$0xff]
    %v519 = vld [vmem:[%s3 + $0x1f8] sm:$0xff]
    %v520 = vpack.c.bf16 %v433, %v432
    %v521 = vpack.c.bf16 %v435, %v434
    %v522 = vpack.c.bf16 %v437, %v436
    %v523 = vpack.c.bf16 %v439, %v438
    %v524 = vpack.c.bf16 %v441, %v440
    %v525 = vpack.c.bf16 %v443, %v442
    %v526 = vpack.c.bf16 %v445, %v444
    %v527 = vpack.c.bf16 %v447, %v446
    %v528 = vpack.c.bf16 %v449, %v448
    %v529 = vpack.c.bf16 %v451, %v450
    %v530 = vpack.c.bf16 %v453, %v452
    %v531 = vpack.c.bf16 %v455, %v454
    %v532 = vld [vmem:[%s4] sm:$0xff]
    %v533 = vld [vmem:[%s4 + $0x8] sm:$0xff]
    %v534 = vld [vmem:[%s4 + $0x10] sm:$0xff]
    %v535 = vld [vmem:[%s4 + $0x18] sm:$0xff]
    %v536 = vld [vmem:[%s4 + $0x20] sm:$0xff]
    %v537 = vld [vmem:[%s4 + $0x28] sm:$0xff]
    %v538 = vld [vmem:[%s4 + $0x30] sm:$0xff]
    %v539 = vld [vmem:[%s4 + $0x38] sm:$0xff]
    %v540 = vld [vmem:[%s4 + $0x40] sm:$0xff]
    %v541 = vld [vmem:[%s4 + $0x48] sm:$0xff]
    %v542 = vld [vmem:[%s4 + $0x50] sm:$0xff]
    %v543 = vld [vmem:[%s4 + $0x58] sm:$0xff]
    %v544 = vld [vmem:[%s4 + $0x60] sm:$0xff]
    %v545 = vld [vmem:[%s4 + $0x68] sm:$0xff]
    %v546 = vld [vmem:[%s4 + $0x70] sm:$0xff]
    %v547 = vld [vmem:[%s4 + $0x78] sm:$0xff]
    %v548 = vld [vmem:[%s4 + $0x80] sm:$0xff]
    %v549 = vld [vmem:[%s4 + $0x88] sm:$0xff]
    %v550 = vld [vmem:[%s4 + $0x90] sm:$0xff]
    %v551 = vld [vmem:[%s4 + $0x98] sm:$0xff]
    %v552 = vld [vmem:[%s4 + $0xa0] sm:$0xff]
    %v553 = vld [vmem:[%s4 + $0xa8] sm:$0xff]
    %v554 = vld [vmem:[%s4 + $0xb0] sm:$0xff]
    %v555 = vld [vmem:[%s4 + $0xb8] sm:$0xff]
    %v556 = vld [vmem:[%s4 + $0xc0] sm:$0xff]
    %v557 = vld [vmem:[%s4 + $0xc8] sm:$0xff]
    %v558 = vld [vmem:[%s4 + $0xd0] sm:$0xff]
    %v559 = vld [vmem:[%s4 + $0xd8] sm:$0xff]
    %v560 = vld [vmem:[%s4 + $0xe0] sm:$0xff]
    %v561 = vld [vmem:[%s4 + $0xe8] sm:$0xff]
    %v562 = vld [vmem:[%s4 + $0xf0] sm:$0xff]
    %v563 = vld [vmem:[%s4 + $0xf8] sm:$0xff]
    %v564 = vld [vmem:[%s4 + $0x100] sm:$0xff]
    %v565 = vld [vmem:[%s4 + $0x108] sm:$0xff]
    %v566 = vld [vmem:[%s4 + $0x110] sm:$0xff]
    %v567 = vld [vmem:[%s4 + $0x118] sm:$0xff]
    %v568 = vld [vmem:[%s4 + $0x120] sm:$0xff]
    %v569 = vld [vmem:[%s4 + $0x128] sm:$0xff]
    %v570 = vld [vmem:[%s4 + $0x130] sm:$0xff]
    %v571 = vld [vmem:[%s4 + $0x138] sm:$0xff]
    %v572 = vld [vmem:[%s4 + $0x140] sm:$0xff]
    %v573 = vld [vmem:[%s4 + $0x148] sm:$0xff]
    %v574 = vld [vmem:[%s4 + $0x150] sm:$0xff]
    %v575 = vld [vmem:[%s4 + $0x158] sm:$0xff]
    %v576 = vld [vmem:[%s4 + $0x160] sm:$0xff]
    %v577 = vld [vmem:[%s4 + $0x168] sm:$0xff]
    %v578 = vld [vmem:[%s4 + $0x170] sm:$0xff]
    %v579 = vld [vmem:[%s4 + $0x178] sm:$0xff]
    %v580 = vld [vmem:[%s4 + $0x180] sm:$0xff]
    %v581 = vld [vmem:[%s4 + $0x188] sm:$0xff]
    %v582 = vld [vmem:[%s4 + $0x190] sm:$0xff]
    %v583 = vld [vmem:[%s4 + $0x198] sm:$0xff]
    %v584 = vld [vmem:[%s4 + $0x1a0] sm:$0xff]
    %v585 = vld [vmem:[%s4 + $0x1a8] sm:$0xff]
    %v586 = vld [vmem:[%s4 + $0x1b0] sm:$0xff]
    %v587 = vld [vmem:[%s4 + $0x1b8] sm:$0xff]
    %v588 = vld [vmem:[%s4 + $0x1c0] sm:$0xff]
    %v589 = vld [vmem:[%s4 + $0x1c8] sm:$0xff]
    %v590 = vld [vmem:[%s4 + $0x1d0] sm:$0xff]
    %v591 = vld [vmem:[%s4 + $0x1d8] sm:$0xff]
    %v592 = vld [vmem:[%s4 + $0x1e0] sm:$0xff]
    %v593 = vld [vmem:[%s4 + $0x1e8] sm:$0xff]
    %v594 = vld [vmem:[%s4 + $0x1f0] sm:$0xff]
    %v595 = vld [vmem:[%s4 + $0x1f8] sm:$0xff]
    %597 = vset.pattern.permute.xlu0 0
    %598 = vperm.xlu0 %597, %v532
    %v599 = vpop.permute.xlu0 %598
    %602 = vset.pattern.permute.xlu0 0
    %603 = vperm.xlu0 %602, %v533
    %v604 = vpop.permute.xlu0 %603
    %607 = vset.pattern.permute.xlu0 0
    %608 = vperm.xlu0 %607, %v534
    %v609 = vpop.permute.xlu0 %608
    %612 = vset.pattern.permute.xlu0 0
    %613 = vperm.xlu0 %612, %v535
    %v614 = vpop.permute.xlu0 %613
    %617 = vset.pattern.permute.xlu0 0
    %618 = vperm.xlu0 %617, %v536
    %v619 = vpop.permute.xlu0 %618
    %622 = vset.pattern.permute.xlu0 0
    %623 = vperm.xlu0 %622, %v537
    %v624 = vpop.permute.xlu0 %623
    %627 = vset.pattern.permute.xlu0 0
    %628 = vperm.xlu0 %627, %v538
    %v629 = vpop.permute.xlu0 %628
    %632 = vset.pattern.permute.xlu0 0
    %633 = vperm.xlu0 %632, %v539
    %v634 = vpop.permute.xlu0 %633
    %637 = vset.pattern.permute.xlu0 0
    %638 = vperm.xlu0 %637, %v540
    %v639 = vpop.permute.xlu0 %638
    %642 = vset.pattern.permute.xlu0 0
    %643 = vperm.xlu0 %642, %v541
    %v644 = vpop.permute.xlu0 %643
    %647 = vset.pattern.permute.xlu0 0
    %648 = vperm.xlu0 %647, %v542
    %v649 = vpop.permute.xlu0 %648
    %652 = vset.pattern.permute.xlu0 0
    %653 = vperm.xlu0 %652, %v543
    %v654 = vpop.permute.xlu0 %653
    %657 = vset.pattern.permute.xlu0 0
    %658 = vperm.xlu0 %657, %v544
    %v659 = vpop.permute.xlu0 %658
    %662 = vset.pattern.permute.xlu0 0
    %663 = vperm.xlu0 %662, %v545
    %v664 = vpop.permute.xlu0 %663
    %667 = vset.pattern.permute.xlu0 0
    %668 = vperm.xlu0 %667, %v546
    %v669 = vpop.permute.xlu0 %668
    %672 = vset.pattern.permute.xlu0 0
    %673 = vperm.xlu0 %672, %v547
    %v674 = vpop.permute.xlu0 %673
    %677 = vset.pattern.permute.xlu0 0
    %678 = vperm.xlu0 %677, %v548
    %v679 = vpop.permute.xlu0 %678
    %682 = vset.pattern.permute.xlu0 0
    %683 = vperm.xlu0 %682, %v549
    %v684 = vpop.permute.xlu0 %683
    %687 = vset.pattern.permute.xlu0 0
    %688 = vperm.xlu0 %687, %v550
    %v689 = vpop.permute.xlu0 %688
    %692 = vset.pattern.permute.xlu0 0
    %693 = vperm.xlu0 %692, %v551
    %v694 = vpop.permute.xlu0 %693
    %697 = vset.pattern.permute.xlu0 0
    %698 = vperm.xlu0 %697, %v552
    %v699 = vpop.permute.xlu0 %698
    %702 = vset.pattern.permute.xlu0 0
    %703 = vperm.xlu0 %702, %v553
    %v704 = vpop.permute.xlu0 %703
    %707 = vset.pattern.permute.xlu0 0
    %708 = vperm.xlu0 %707, %v554
    %v709 = vpop.permute.xlu0 %708
    %712 = vset.pattern.permute.xlu0 0
    %713 = vperm.xlu0 %712, %v555
    %v714 = vpop.permute.xlu0 %713
    %717 = vset.pattern.permute.xlu0 0
    %718 = vperm.xlu0 %717, %v556
    %v719 = vpop.permute.xlu0 %718
    %722 = vset.pattern.permute.xlu0 0
    %723 = vperm.xlu0 %722, %v557
    %v724 = vpop.permute.xlu0 %723
    %727 = vset.pattern.permute.xlu0 0
    %728 = vperm.xlu0 %727, %v558
    %v729 = vpop.permute.xlu0 %728
    %732 = vset.pattern.permute.xlu0 0
    %733 = vperm.xlu0 %732, %v559
    %v734 = vpop.permute.xlu0 %733
    %737 = vset.pattern.permute.xlu0 0
    %738 = vperm.xlu0 %737, %v560
    %v739 = vpop.permute.xlu0 %738
    %742 = vset.pattern.permute.xlu0 0
    %743 = vperm.xlu0 %742, %v561
    %v744 = vpop.permute.xlu0 %743
    %747 = vset.pattern.permute.xlu0 0
    %748 = vperm.xlu0 %747, %v562
    %v749 = vpop.permute.xlu0 %748
    %752 = vset.pattern.permute.xlu0 0
    %753 = vperm.xlu0 %752, %v563
    %v754 = vpop.permute.xlu0 %753
    %757 = vset.pattern.permute.xlu0 0
    %758 = vperm.xlu0 %757, %v564
    %v759 = vpop.permute.xlu0 %758
    %762 = vset.pattern.permute.xlu0 0
    %763 = vperm.xlu0 %762, %v565
    %v764 = vpop.permute.xlu0 %763
    %767 = vset.pattern.permute.xlu0 0
    %768 = vperm.xlu0 %767, %v566
    %v769 = vpop.permute.xlu0 %768
    %772 = vset.pattern.permute.xlu0 0
    %773 = vperm.xlu0 %772, %v567
    %v774 = vpop.permute.xlu0 %773
    %777 = vset.pattern.permute.xlu0 0
    %778 = vperm.xlu0 %777, %v568
    %v779 = vpop.permute.xlu0 %778
    %782 = vset.pattern.permute.xlu0 0
    %783 = vperm.xlu0 %782, %v569
    %v784 = vpop.permute.xlu0 %783
    %787 = vset.pattern.permute.xlu0 0
    %788 = vperm.xlu0 %787, %v570
    %v789 = vpop.permute.xlu0 %788
    %792 = vset.pattern.permute.xlu0 0
    %793 = vperm.xlu0 %792, %v571
    %v794 = vpop.permute.xlu0 %793
    %797 = vset.pattern.permute.xlu0 0
    %798 = vperm.xlu0 %797, %v572
    %v799 = vpop.permute.xlu0 %798
    %802 = vset.pattern.permute.xlu0 0
    %803 = vperm.xlu0 %802, %v573
    %v804 = vpop.permute.xlu0 %803
    %807 = vset.pattern.permute.xlu0 0
    %808 = vperm.xlu0 %807, %v574
    %v809 = vpop.permute.xlu0 %808
    %812 = vset.pattern.permute.xlu0 0
    %813 = vperm.xlu0 %812, %v575
    %v814 = vpop.permute.xlu0 %813
    %817 = vset.pattern.permute.xlu0 0
    %818 = vperm.xlu0 %817, %v576
    %v819 = vpop.permute.xlu0 %818
    %822 = vset.pattern.permute.xlu0 0
    %823 = vperm.xlu0 %822, %v577
    %v824 = vpop.permute.xlu0 %823
    %827 = vset.pattern.permute.xlu0 0
    %828 = vperm.xlu0 %827, %v578
    %v829 = vpop.permute.xlu0 %828
    %832 = vset.pattern.permute.xlu0 0
    %833 = vperm.xlu0 %832, %v579
    %v834 = vpop.permute.xlu0 %833
    %837 = vset.pattern.permute.xlu0 0
    %838 = vperm.xlu0 %837, %v580
    %v839 = vpop.permute.xlu0 %838
    %842 = vset.pattern.permute.xlu0 0
    %843 = vperm.xlu0 %842, %v581
    %v844 = vpop.permute.xlu0 %843
    %847 = vset.pattern.permute.xlu0 0
    %848 = vperm.xlu0 %847, %v582
    %v849 = vpop.permute.xlu0 %848
    %852 = vset.pattern.permute.xlu0 0
    %853 = vperm.xlu0 %852, %v583
    %v854 = vpop.permute.xlu0 %853
    %857 = vset.pattern.permute.xlu0 0
    %858 = vperm.xlu0 %857, %v584
    %v859 = vpop.permute.xlu0 %858
    %862 = vset.pattern.permute.xlu0 0
    %863 = vperm.xlu0 %862, %v585
    %v864 = vpop.permute.xlu0 %863
    %867 = vset.pattern.permute.xlu0 0
    %868 = vperm.xlu0 %867, %v586
    %v869 = vpop.permute.xlu0 %868
    %872 = vset.pattern.permute.xlu0 0
    %873 = vperm.xlu0 %872, %v587
    %v874 = vpop.permute.xlu0 %873
    %877 = vset.pattern.permute.xlu0 0
    %878 = vperm.xlu0 %877, %v588
    %v879 = vpop.permute.xlu0 %878
    %882 = vset.pattern.permute.xlu0 0
    %883 = vperm.xlu0 %882, %v589
    %v884 = vpop.permute.xlu0 %883
    %887 = vset.pattern.permute.xlu0 0
    %888 = vperm.xlu0 %887, %v590
    %v889 = vpop.permute.xlu0 %888
    %892 = vset.pattern.permute.xlu0 0
    %893 = vperm.xlu0 %892, %v591
    %v894 = vpop.permute.xlu0 %893
    %897 = vset.pattern.permute.xlu0 0
    %898 = vperm.xlu0 %897, %v592
    %v899 = vpop.permute.xlu0 %898
    %902 = vset.pattern.permute.xlu0 0
    %903 = vperm.xlu0 %902, %v593
    %v904 = vpop.permute.xlu0 %903
    %907 = vset.pattern.permute.xlu0 0
    %908 = vperm.xlu0 %907, %v594
    %v909 = vpop.permute.xlu0 %908
    %912 = vset.pattern.permute.xlu0 0
    %913 = vperm.xlu0 %912, %v595
    %v914 = vpop.permute.xlu0 %913
    %v980 = vunpack.c.l.b16 %v456
    %v981 = vunpack.c.h.b16 %v456
    %v982 = vunpack.c.l.b16 %v457
    %v983 = vunpack.c.h.b16 %v457
    %v984 = vunpack.c.l.b16 %v458
    %v985 = vunpack.c.h.b16 %v458
    %v986 = vunpack.c.l.b16 %v459
    %v987 = vunpack.c.h.b16 %v459
    %v988 = vunpack.c.l.b16 %v460
    %v989 = vunpack.c.h.b16 %v460
    %v990 = vunpack.c.l.b16 %v461
    %v991 = vunpack.c.h.b16 %v461
    %v992 = vunpack.c.l.b16 %v462
    %v993 = vunpack.c.h.b16 %v462
    %v994 = vunpack.c.l.b16 %v463
    %v995 = vunpack.c.h.b16 %v463
    %v996 = vunpack.c.l.b16 %v464
    %v997 = vunpack.c.h.b16 %v464
    %v998 = vunpack.c.l.b16 %v465
    %v999 = vunpack.c.h.b16 %v465
    %v1000 = vunpack.c.l.b16 %v466
    %v1001 = vunpack.c.h.b16 %v466
    %v1002 = vunpack.c.l.b16 %v467
    %v1003 = vunpack.c.h.b16 %v467
    %v1004 = vunpack.c.l.b16 %v468
    %v1005 = vunpack.c.h.b16 %v468
    %v1006 = vunpack.c.l.b16 %v469
    %v1007 = vunpack.c.h.b16 %v469
    %v1008 = vunpack.c.l.b16 %v470
    %v1009 = vunpack.c.h.b16 %v470
    %v1010 = vunpack.c.l.b16 %v471
    %v1011 = vunpack.c.h.b16 %v471
    %v1012 = vunpack.c.l.b16 %v472
    %v1013 = vunpack.c.h.b16 %v472
    %v1014 = vunpack.c.l.b16 %v473
    %v1015 = vunpack.c.h.b16 %v473
    %v1016 = vunpack.c.l.b16 %v474
    %v1017 = vunpack.c.h.b16 %v474
    %v1018 = vunpack.c.l.b16 %v475
    %v1019 = vunpack.c.h.b16 %v475
    %v1020 = vunpack.c.l.b16 %v476
    %v1021 = vunpack.c.h.b16 %v476
    %v1022 = vunpack.c.l.b16 %v477
    %v1023 = vunpack.c.h.b16 %v477
    %v1024 = vunpack.c.l.b16 %v478
    %v1025 = vunpack.c.h.b16 %v478
    %v1026 = vunpack.c.l.b16 %v479
    %v1027 = vunpack.c.h.b16 %v479
    %v1028 = vunpack.c.l.b16 %v480
    %v1029 = vunpack.c.h.b16 %v480
    %v1030 = vunpack.c.l.b16 %v481
    %v1031 = vunpack.c.h.b16 %v481
    %v1032 = vunpack.c.l.b16 %v482
    %v1033 = vunpack.c.h.b16 %v482
    %v1034 = vunpack.c.l.b16 %v483
    %v1035 = vunpack.c.h.b16 %v483
    %v1036 = vunpack.c.l.b16 %v484
    %v1037 = vunpack.c.h.b16 %v484
    %v1038 = vunpack.c.l.b16 %v485
    %v1039 = vunpack.c.h.b16 %v485
    %v1040 = vunpack.c.l.b16 %v486
    %v1041 = vunpack.c.h.b16 %v486
    %v1042 = vunpack.c.l.b16 %v487
    %v1043 = vunpack.c.h.b16 %v487
    %v1044 = vunpack.c.l.b16 %v488
    %v1045 = vunpack.c.h.b16 %v488
    %v1046 = vunpack.c.l.b16 %v489
    %v1047 = vunpack.c.h.b16 %v489
    %v1048 = vunpack.c.l.b16 %v490
    %v1049 = vunpack.c.h.b16 %v490
    %v1050 = vunpack.c.l.b16 %v491
    %v1051 = vunpack.c.h.b16 %v491
    %v1052 = vunpack.c.l.b16 %v492
    %v1053 = vunpack.c.h.b16 %v492
    %v1054 = vunpack.c.l.b16 %v493
    %v1055 = vunpack.c.h.b16 %v493
    %v1056 = vunpack.c.l.b16 %v494
    %v1057 = vunpack.c.h.b16 %v494
    %v1058 = vunpack.c.l.b16 %v495
    %v1059 = vunpack.c.h.b16 %v495
    %v1060 = vunpack.c.l.b16 %v496
    %v1061 = vunpack.c.h.b16 %v496
    %v1062 = vunpack.c.l.b16 %v497
    %v1063 = vunpack.c.h.b16 %v497
    %v1064 = vunpack.c.l.b16 %v498
    %v1065 = vunpack.c.h.b16 %v498
    %v1066 = vunpack.c.l.b16 %v499
    %v1067 = vunpack.c.h.b16 %v499
    %v1068 = vunpack.c.l.b16 %v500
    %v1069 = vunpack.c.h.b16 %v500
    %v1070 = vunpack.c.l.b16 %v501
    %v1071 = vunpack.c.h.b16 %v501
    %v1072 = vunpack.c.l.b16 %v502
    %v1073 = vunpack.c.h.b16 %v502
    %v1074 = vunpack.c.l.b16 %v503
    %v1075 = vunpack.c.h.b16 %v503
    %v1076 = vunpack.c.l.b16 %v504
    %v1077 = vunpack.c.h.b16 %v504
    %v1078 = vunpack.c.l.b16 %v505
    %v1079 = vunpack.c.h.b16 %v505
    %v1080 = vunpack.c.l.b16 %v506
    %v1081 = vunpack.c.h.b16 %v506
    %v1082 = vunpack.c.l.b16 %v507
    %v1083 = vunpack.c.h.b16 %v507
    %v1084 = vunpack.c.l.b16 %v508
    %v1085 = vunpack.c.h.b16 %v508
    %v1086 = vunpack.c.l.b16 %v509
    %v1087 = vunpack.c.h.b16 %v509
    %v1088 = vunpack.c.l.b16 %v510
    %v1089 = vunpack.c.h.b16 %v510
    %v1090 = vunpack.c.l.b16 %v511
    %v1091 = vunpack.c.h.b16 %v511
    %v1092 = vunpack.c.l.b16 %v512
    %v1093 = vunpack.c.h.b16 %v512
    %v1094 = vunpack.c.l.b16 %v513
    %v1095 = vunpack.c.h.b16 %v513
    %v1096 = vunpack.c.l.b16 %v514
    %v1097 = vunpack.c.h.b16 %v514
    %v1098 = vunpack.c.l.b16 %v515
    %v1099 = vunpack.c.h.b16 %v515
    %v1100 = vunpack.c.l.b16 %v516
    %v1101 = vunpack.c.h.b16 %v516
    %v1102 = vunpack.c.l.b16 %v517
    %v1103 = vunpack.c.h.b16 %v517
    %v1104 = vunpack.c.l.b16 %v518
    %v1105 = vunpack.c.h.b16 %v518
    %v1106 = vunpack.c.l.b16 %v519
    %v1107 = vunpack.c.h.b16 %v519
    %v1108 = vpack.c.b16 %v982, %v980
    %v1109 = vpack.c.b16 %v983, %v981
    %v1110 = vpack.c.b16 %v986, %v984
    %v1111 = vpack.c.b16 %v987, %v985
    %v1112 = vpack.c.b16 %v990, %v988
    %v1113 = vpack.c.b16 %v991, %v989
    %v1114 = vpack.c.b16 %v994, %v992
    %v1115 = vpack.c.b16 %v995, %v993
    %v1116 = vpack.c.b16 %v998, %v996
    %v1117 = vpack.c.b16 %v999, %v997
    %v1118 = vpack.c.b16 %v1002, %v1000
    %v1119 = vpack.c.b16 %v1003, %v1001
    %v1120 = vpack.c.b16 %v1006, %v1004
    %v1121 = vpack.c.b16 %v1007, %v1005
    %v1122 = vpack.c.b16 %v1010, %v1008
    %v1123 = vpack.c.b16 %v1011, %v1009
    %v1124 = vpack.c.b16 %v1014, %v1012
    %v1125 = vpack.c.b16 %v1015, %v1013
    %v1126 = vpack.c.b16 %v1018, %v1016
    %v1127 = vpack.c.b16 %v1019, %v1017
    %v1128 = vpack.c.b16 %v1022, %v1020
    %v1129 = vpack.c.b16 %v1023, %v1021
    %v1130 = vpack.c.b16 %v1026, %v1024
    %v1131 = vpack.c.b16 %v1027, %v1025
    %v1132 = vpack.c.b16 %v1030, %v1028
    %v1133 = vpack.c.b16 %v1031, %v1029
    %v1134 = vpack.c.b16 %v1034, %v1032
    %v1135 = vpack.c.b16 %v1035, %v1033
    %v1136 = vpack.c.b16 %v1038, %v1036
    %v1137 = vpack.c.b16 %v1039, %v1037
    %v1138 = vpack.c.b16 %v1042, %v1040
    %v1139 = vpack.c.b16 %v1043, %v1041
    %v1140 = vpack.c.b16 %v1046, %v1044
    %v1141 = vpack.c.b16 %v1047, %v1045
    %v1142 = vpack.c.b16 %v1050, %v1048
    %v1143 = vpack.c.b16 %v1051, %v1049
    %v1144 = vpack.c.b16 %v1054, %v1052
    %v1145 = vpack.c.b16 %v1055, %v1053
    %v1146 = vpack.c.b16 %v1058, %v1056
    %v1147 = vpack.c.b16 %v1059, %v1057
    %v1148 = vpack.c.b16 %v1062, %v1060
    %v1149 = vpack.c.b16 %v1063, %v1061
    %v1150 = vpack.c.b16 %v1066, %v1064
    %v1151 = vpack.c.b16 %v1067, %v1065
    %v1152 = vpack.c.b16 %v1070, %v1068
    %v1153 = vpack.c.b16 %v1071, %v1069
    %v1154 = vpack.c.b16 %v1074, %v1072
    %v1155 = vpack.c.b16 %v1075, %v1073
    %v1156 = vpack.c.b16 %v1078, %v1076
    %v1157 = vpack.c.b16 %v1079, %v1077
    %v1158 = vpack.c.b16 %v1082, %v1080
    %v1159 = vpack.c.b16 %v1083, %v1081
    %v1160 = vpack.c.b16 %v1086, %v1084
    %v1161 = vpack.c.b16 %v1087, %v1085
    %v1162 = vpack.c.b16 %v1090, %v1088
    %v1163 = vpack.c.b16 %v1091, %v1089
    %v1164 = vpack.c.b16 %v1094, %v1092
    %v1165 = vpack.c.b16 %v1095, %v1093
    %v1166 = vpack.c.b16 %v1098, %v1096
    %v1167 = vpack.c.b16 %v1099, %v1097
    %v1168 = vpack.c.b16 %v1102, %v1100
    %v1169 = vpack.c.b16 %v1103, %v1101
    %v1170 = vpack.c.b16 %v1106, %v1104
    %v1171 = vpack.c.b16 %v1107, %v1105
    %vm1204 = vcmask 523264
    %v1206 = vsel %vm1204, %v1109, 0
    %v1209 = vsel %vm1204, %v1111, 0
    %v1212 = vsel %vm1204, %v1113, 0
    %v1215 = vsel %vm1204, %v1115, 0
    %v1218 = vsel %vm1204, %v1117, 0
    %v1221 = vsel %vm1204, %v1119, 0
    %v1224 = vsel %vm1204, %v1121, 0
    %v1227 = vsel %vm1204, %v1123, 0
    %v1230 = vsel %vm1204, %v1125, 0
    %v1233 = vsel %vm1204, %v1127, 0
    %v1236 = vsel %vm1204, %v1129, 0
    %v1239 = vsel %vm1204, %v1131, 0
    %v1242 = vsel %vm1204, %v1133, 0
    %v1245 = vsel %vm1204, %v1135, 0
    %v1248 = vsel %vm1204, %v1137, 0
    %v1251 = vsel %vm1204, %v1139, 0
    %v1254 = vsel %vm1204, %v1141, 0
    %v1257 = vsel %vm1204, %v1143, 0
    %v1260 = vsel %vm1204, %v1145, 0
    %v1263 = vsel %vm1204, %v1147, 0
    %v1266 = vsel %vm1204, %v1149, 0
    %v1269 = vsel %vm1204, %v1151, 0
    %v1272 = vsel %vm1204, %v1153, 0
    %v1275 = vsel %vm1204, %v1155, 0
    %v1278 = vsel %vm1204, %v1157, 0
    %v1281 = vsel %vm1204, %v1159, 0
    %v1284 = vsel %vm1204, %v1161, 0
    %v1287 = vsel %vm1204, %v1163, 0
    %v1290 = vsel %vm1204, %v1165, 0
    %v1293 = vsel %vm1204, %v1167, 0
    %v1296 = vsel %vm1204, %v1169, 0
    %v1299 = vsel %vm1204, %v1171, 0
    %1301 = vmatprep.subr.bf16.mxu0 0
    %1302 = vmatpush1.bf16.msra.mxu0 %v520
    %1303 = vmatprep.subr.bf16.mxu0 0
    %1304 = vmatpush1.bf16.msra.mxu0 %v521
    %1305 = vmatprep.subr.bf16.mxu0 0
    %1306 = vmatpush1.bf16.msra.mxu0 %v522
    %1307 = vmatprep.subr.bf16.mxu0 0
    %1308 = vmatpush1.bf16.msra.mxu0 %v523
    %1309 = vmatprep.subr.bf16.mxu0 0
    %1310 = vmatpush1.bf16.msra.mxu0 %v524
    %1311 = vmatprep.subr.bf16.mxu0 0
    %1312 = vmatpush1.bf16.msra.mxu0 %v525
    %1313 = vmatprep.subr.bf16.mxu0 0
    %1314 = vmatpush1.bf16.msra.mxu0 %v526
    %1315 = vmatprep.subr.bf16.mxu0 0
    %1316 = vmatpush1.bf16.msra.mxu0 %v527
    %1317 = vmatprep.subr.bf16.mxu0 0
    %1318 = vmatpush1.bf16.msra.mxu0 %v528
    %1319 = vmatprep.subr.bf16.mxu0 0
    %1320 = vmatpush1.bf16.msra.mxu0 %v529
    %1321 = vmatprep.subr.bf16.mxu0 0
    %1322 = vmatpush1.bf16.msra.mxu0 %v530
    %1323 = vmatprep.subr.bf16.mxu0 0
    %1324 = vmatpush1.bf16.msra.mxu0 %v531
    %1325 = vmatprep.subr.bf16.mxu0 0
    %1326 = vmatpush1.bf16.msra.mxu0 0
    %1327 = vmatprep.subr.bf16.mxu0 0
    %1328 = vmatpush1.bf16.msra.mxu0 0
    %1329 = vmatprep.subr.bf16.mxu0 0
    %1330 = vmatpush1.bf16.msra.mxu0 0
    %1331 = vmatprep.subr.bf16.mxu0 0
    %1332 = vmatpush1.bf16.msra.mxu0 0
    %1333 = vmatprep.mubr.bf16.mxu0 %v1206
    %1334 = vmatmul.mubr.bf16.gmra.mrb[0].mxu0 %v1108
    %v1335 = vpop.f32.mrb[0].mxu0
    %v1336 = vadd.f32 %v599, %v1335
    %v1337 = vpop.f32.mrb[0].mxu0
    %v1338 = vpop.f32.mrb[0].mxu0
    %v1339 = vadd.f32 %v604, %v1338
    %v1340 = vpop.f32.mrb[0].mxu0
    %1341 = vmatprep.mubr.bf16.mxu0 %v1209
    %1342 = vmatmul.mubr.bf16.gmra.mrb[0].mxu0 %v1110
    %v1343 = vpop.f32.mrb[0].mxu0
    %v1344 = vadd.f32 %v609, %v1343
    %v1345 = vpop.f32.mrb[0].mxu0
    %v1346 = vpop.f32.mrb[0].mxu0
    %v1347 = vadd.f32 %v614, %v1346
    %v1348 = vpop.f32.mrb[0].mxu0
    %1349 = vmatprep.mubr.bf16.mxu0 %v1212
    %1350 = vmatmul.mubr.bf16.gmra.mrb[0].mxu0 %v1112
    %v1351 = vpop.f32.mrb[0].mxu0
    %v1352 = vadd.f32 %v619, %v1351
    %v1353 = vpop.f32.mrb[0].mxu0
    %v1354 = vpop.f32.mrb[0].mxu0
    %v1355 = vadd.f32 %v624, %v1354
    %v1356 = vpop.f32.mrb[0].mxu0
    %1357 = vmatprep.mubr.bf16.mxu0 %v1215
    %1358 = vmatmul.mubr.bf16.gmra.mrb[0].mxu0 %v1114
    %v1359 = vpop.f32.mrb[0].mxu0
    %v1360 = vadd.f32 %v629, %v1359
    %v1361 = vpop.f32.mrb[0].mxu0
    %v1362 = vpop.f32.mrb[0].mxu0
    %v1363 = vadd.f32 %v634, %v1362
    %v1364 = vpop.f32.mrb[0].mxu0
    %1365 = vmatprep.mubr.bf16.mxu0 %v1218
    %1366 = vmatmul.mubr.bf16.gmra.mrb[0].mxu0 %v1116
    %v1367 = vpop.f32.mrb[0].mxu0
    %v1368 = vadd.f32 %v639, %v1367
    %v1369 = vpop.f32.mrb[0].mxu0
    %v1370 = vpop.f32.mrb[0].mxu0
    %v1371 = vadd.f32 %v644, %v1370
    %v1372 = vpop.f32.mrb[0].mxu0
    %1373 = vmatprep.mubr.bf16.mxu0 %v1221
    %1374 = vmatmul.mubr.bf16.gmra.mrb[0].mxu0 %v1118
    %v1375 = vpop.f32.mrb[0].mxu0
    %v1376 = vadd.f32 %v649, %v1375
    %v1377 = vpop.f32.mrb[0].mxu0
    %v1378 = vpop.f32.mrb[0].mxu0
    %v1379 = vadd.f32 %v654, %v1378
    %v1380 = vpop.f32.mrb[0].mxu0
    %1381 = vmatprep.mubr.bf16.mxu0 %v1224
    %1382 = vmatmul.mubr.bf16.gmra.mrb[0].mxu0 %v1120
    %v1383 = vpop.f32.mrb[0].mxu0
    %v1384 = vadd.f32 %v659, %v1383
    %v1385 = vpop.f32.mrb[0].mxu0
    %v1386 = vpop.f32.mrb[0].mxu0
    %v1387 = vadd.f32 %v664, %v1386
    %v1388 = vpop.f32.mrb[0].mxu0
    %1389 = vmatprep.mubr.bf16.mxu0 %v1227
    %1390 = vmatmul.mubr.bf16.gmra.mrb[0].mxu0 %v1122
    %v1391 = vpop.f32.mrb[0].mxu0
    %v1392 = vadd.f32 %v669, %v1391
    %v1393 = vpop.f32.mrb[0].mxu0
    %v1394 = vpop.f32.mrb[0].mxu0
    %v1395 = vadd.f32 %v674, %v1394
    %v1396 = vpop.f32.mrb[0].mxu0
    %1397 = vmatprep.mubr.bf16.mxu0 %v1230
    %1398 = vmatmul.mubr.bf16.gmra.mrb[0].mxu0 %v1124
    %v1399 = vpop.f32.mrb[0].mxu0
    %v1400 = vadd.f32 %v679, %v1399
    %v1401 = vpop.f32.mrb[0].mxu0
    %v1402 = vpop.f32.mrb[0].mxu0
    %v1403 = vadd.f32 %v684, %v1402
    %v1404 = vpop.f32.mrb[0].mxu0
    %1405 = vmatprep.mubr.bf16.mxu0 %v1233
    %1406 = vmatmul.mubr.bf16.gmra.mrb[0].mxu0 %v1126
    %v1407 = vpop.f32.mrb[0].mxu0
    %v1408 = vadd.f32 %v689, %v1407
    %v1409 = vpop.f32.mrb[0].mxu0
    %v1410 = vpop.f32.mrb[0].mxu0
    %v1411 = vadd.f32 %v694, %v1410
    %v1412 = vpop.f32.mrb[0].mxu0
    %1413 = vmatprep.mubr.bf16.mxu0 %v1236
    %1414 = vmatmul.mubr.bf16.gmra.mrb[0].mxu0 %v1128
    %v1415 = vpop.f32.mrb[0].mxu0
    %v1416 = vadd.f32 %v699, %v1415
    %v1417 = vpop.f32.mrb[0].mxu0
    %v1418 = vpop.f32.mrb[0].mxu0
    %v1419 = vadd.f32 %v704, %v1418
    %v1420 = vpop.f32.mrb[0].mxu0
    %1421 = vmatprep.mubr.bf16.mxu0 %v1239
    %1422 = vmatmul.mubr.bf16.gmra.mrb[0].mxu0 %v1130
    %v1423 = vpop.f32.mrb[0].mxu0
    %v1424 = vadd.f32 %v709, %v1423
    %v1425 = vpop.f32.mrb[0].mxu0
    %v1426 = vpop.f32.mrb[0].mxu0
    %v1427 = vadd.f32 %v714, %v1426
    %v1428 = vpop.f32.mrb[0].mxu0
    %1429 = vmatprep.mubr.bf16.mxu0 %v1242
    %1430 = vmatmul.mubr.bf16.gmra.mrb[0].mxu0 %v1132
    %v1431 = vpop.f32.mrb[0].mxu0
    %v1432 = vadd.f32 %v719, %v1431
    %v1433 = vpop.f32.mrb[0].mxu0
    %v1434 = vpop.f32.mrb[0].mxu0
    %v1435 = vadd.f32 %v724, %v1434
    %v1436 = vpop.f32.mrb[0].mxu0
    %1437 = vmatprep.mubr.bf16.mxu0 %v1245
    %1438 = vmatmul.mubr.bf16.gmra.mrb[0].mxu0 %v1134
    %v1439 = vpop.f32.mrb[0].mxu0
    %v1440 = vadd.f32 %v729, %v1439
    %v1441 = vpop.f32.mrb[0].mxu0
    %v1442 = vpop.f32.mrb[0].mxu0
    %v1443 = vadd.f32 %v734, %v1442
    %v1444 = vpop.f32.mrb[0].mxu0
    %1445 = vmatprep.mubr.bf16.mxu0 %v1248
    %1446 = vmatmul.mubr.bf16.gmra.mrb[0].mxu0 %v1136
    %v1447 = vpop.f32.mrb[0].mxu0
    %v1448 = vadd.f32 %v739, %v1447
    %v1449 = vpop.f32.mrb[0].mxu0
    %v1450 = vpop.f32.mrb[0].mxu0
    %v1451 = vadd.f32 %v744, %v1450
    %v1452 = vpop.f32.mrb[0].mxu0
    %1453 = vmatprep.mubr.bf16.mxu0 %v1251
    %1454 = vmatmul.mubr.bf16.gmra.mrb[0].mxu0 %v1138
    %v1455 = vpop.f32.mrb[0].mxu0
    %v1456 = vadd.f32 %v749, %v1455
    %v1457 = vpop.f32.mrb[0].mxu0
    %v1458 = vpop.f32.mrb[0].mxu0
    %v1459 = vadd.f32 %v754, %v1458
    %v1460 = vpop.f32.mrb[0].mxu0
    %1461 = vmatprep.mubr.bf16.mxu0 %v1254
    %1462 = vmatmul.mubr.bf16.gmra.mrb[0].mxu0 %v1140
    %v1463 = vpop.f32.mrb[0].mxu0
    %v1464 = vadd.f32 %v759, %v1463
    %v1465 = vpop.f32.mrb[0].mxu0
    %v1466 = vpop.f32.mrb[0].mxu0
    %v1467 = vadd.f32 %v764, %v1466
    %v1468 = vpop.f32.mrb[0].mxu0
    %1469 = vmatprep.mubr.bf16.mxu0 %v1257
    %1470 = vmatmul.mubr.bf16.gmra.mrb[0].mxu0 %v1142
    %v1471 = vpop.f32.mrb[0].mxu0
    %v1472 = vadd.f32 %v769, %v1471
    %v1473 = vpop.f32.mrb[0].mxu0
    %v1474 = vpop.f32.mrb[0].mxu0
    %v1475 = vadd.f32 %v774, %v1474
    %v1476 = vpop.f32.mrb[0].mxu0
    %1477 = vmatprep.mubr.bf16.mxu0 %v1260
    %1478 = vmatmul.mubr.bf16.gmra.mrb[0].mxu0 %v1144
    %v1479 = vpop.f32.mrb[0].mxu0
    %v1480 = vadd.f32 %v779, %v1479
    %v1481 = vpop.f32.mrb[0].mxu0
    %v1482 = vpop.f32.mrb[0].mxu0
    %v1483 = vadd.f32 %v784, %v1482
    %v1484 = vpop.f32.mrb[0].mxu0
    %1485 = vmatprep.mubr.bf16.mxu0 %v1263
    %1486 = vmatmul.mubr.bf16.gmra.mrb[0].mxu0 %v1146
    %v1487 = vpop.f32.mrb[0].mxu0
    %v1488 = vadd.f32 %v789, %v1487
    %v1489 = vpop.f32.mrb[0].mxu0
    %v1490 = vpop.f32.mrb[0].mxu0
    %v1491 = vadd.f32 %v794, %v1490
    %v1492 = vpop.f32.mrb[0].mxu0
    %1493 = vmatprep.mubr.bf16.mxu0 %v1266
    %1494 = vmatmul.mubr.bf16.gmra.mrb[0].mxu0 %v1148
    %v1495 = vpop.f32.mrb[0].mxu0
    %v1496 = vadd.f32 %v799, %v1495
    %v1497 = vpop.f32.mrb[0].mxu0
    %v1498 = vpop.f32.mrb[0].mxu0
    %v1499 = vadd.f32 %v804, %v1498
    %v1500 = vpop.f32.mrb[0].mxu0
    %1501 = vmatprep.mubr.bf16.mxu0 %v1269
    %1502 = vmatmul.mubr.bf16.gmra.mrb[0].mxu0 %v1150
    %v1503 = vpop.f32.mrb[0].mxu0
    %v1504 = vadd.f32 %v809, %v1503
    %v1505 = vpop.f32.mrb[0].mxu0
    %v1506 = vpop.f32.mrb[0].mxu0
    %v1507 = vadd.f32 %v814, %v1506
    %v1508 = vpop.f32.mrb[0].mxu0
    %1509 = vmatprep.mubr.bf16.mxu0 %v1272
    %1510 = vmatmul.mubr.bf16.gmra.mrb[0].mxu0 %v1152
    %v1511 = vpop.f32.mrb[0].mxu0
    %v1512 = vadd.f32 %v819, %v1511
    %v1513 = vpop.f32.mrb[0].mxu0
    %v1514 = vpop.f32.mrb[0].mxu0
    %v1515 = vadd.f32 %v824, %v1514
    %v1516 = vpop.f32.mrb[0].mxu0
    %1517 = vmatprep.mubr.bf16.mxu0 %v1275
    %1518 = vmatmul.mubr.bf16.gmra.mrb[0].mxu0 %v1154
    %v1519 = vpop.f32.mrb[0].mxu0
    %v1520 = vadd.f32 %v829, %v1519
    %v1521 = vpop.f32.mrb[0].mxu0
    %v1522 = vpop.f32.mrb[0].mxu0
    %v1523 = vadd.f32 %v834, %v1522
    %v1524 = vpop.f32.mrb[0].mxu0
    %1525 = vmatprep.mubr.bf16.mxu0 %v1278
    %1526 = vmatmul.mubr.bf16.gmra.mrb[0].mxu0 %v1156
    %v1527 = vpop.f32.mrb[0].mxu0
    %v1528 = vadd.f32 %v839, %v1527
    %v1529 = vpop.f32.mrb[0].mxu0
    %v1530 = vpop.f32.mrb[0].mxu0
    %v1531 = vadd.f32 %v844, %v1530
    %v1532 = vpop.f32.mrb[0].mxu0
    %1533 = vmatprep.mubr.bf16.mxu0 %v1281
    %1534 = vmatmul.mubr.bf16.gmra.mrb[0].mxu0 %v1158
    %v1535 = vpop.f32.mrb[0].mxu0
    %v1536 = vadd.f32 %v849, %v1535
    %v1537 = vpop.f32.mrb[0].mxu0
    %v1538 = vpop.f32.mrb[0].mxu0
    %v1539 = vadd.f32 %v854, %v1538
    %v1540 = vpop.f32.mrb[0].mxu0
    %1541 = vmatprep.mubr.bf16.mxu0 %v1284
    %1542 = vmatmul.mubr.bf16.gmra.mrb[0].mxu0 %v1160
    %v1543 = vpop.f32.mrb[0].mxu0
    %v1544 = vadd.f32 %v859, %v1543
    %v1545 = vpop.f32.mrb[0].mxu0
    %v1546 = vpop.f32.mrb[0].mxu0
    %v1547 = vadd.f32 %v864, %v1546
    %v1548 = vpop.f32.mrb[0].mxu0
    %1549 = vmatprep.mubr.bf16.mxu0 %v1287
    %1550 = vmatmul.mubr.bf16.gmra.mrb[0].mxu0 %v1162
    %v1551 = vpop.f32.mrb[0].mxu0
    %v1552 = vadd.f32 %v869, %v1551
    %v1553 = vpop.f32.mrb[0].mxu0
    %v1554 = vpop.f32.mrb[0].mxu0
    %v1555 = vadd.f32 %v874, %v1554
    %v1556 = vpop.f32.mrb[0].mxu0
    %1557 = vmatprep.mubr.bf16.mxu0 %v1290
    %1558 = vmatmul.mubr.bf16.gmra.mrb[0].mxu0 %v1164
    %v1559 = vpop.f32.mrb[0].mxu0
    %v1560 = vadd.f32 %v879, %v1559
    %v1561 = vpop.f32.mrb[0].mxu0
    %v1562 = vpop.f32.mrb[0].mxu0
    %v1563 = vadd.f32 %v884, %v1562
    %v1564 = vpop.f32.mrb[0].mxu0
    %1565 = vmatprep.mubr.bf16.mxu0 %v1293
    %1566 = vmatmul.mubr.bf16.gmra.mrb[0].mxu0 %v1166
    %v1567 = vpop.f32.mrb[0].mxu0
    %v1568 = vadd.f32 %v889, %v1567
    %v1569 = vpop.f32.mrb[0].mxu0
    %v1570 = vpop.f32.mrb[0].mxu0
    %v1571 = vadd.f32 %v894, %v1570
    %v1572 = vpop.f32.mrb[0].mxu0
    %1573 = vmatprep.mubr.bf16.mxu0 %v1296
    %1574 = vmatmul.mubr.bf16.gmra.mrb[0].mxu0 %v1168
    %v1575 = vpop.f32.mrb[0].mxu0
    %v1576 = vadd.f32 %v899, %v1575
    %v1577 = vpop.f32.mrb[0].mxu0
    %v1578 = vpop.f32.mrb[0].mxu0
    %v1579 = vadd.f32 %v904, %v1578
    %v1580 = vpop.f32.mrb[0].mxu0
    %1581 = vmatprep.mubr.bf16.mxu0 %v1299
    %1582 = vmatmul.mubr.bf16.gmra.mrb[0].mxu0 %v1170
    %v1583 = vpop.f32.mrb[0].mxu0
    %v1584 = vadd.f32 %v909, %v1583
    %v1585 = vpop.f32.mrb[0].mxu0
    %v1586 = vpop.f32.mrb[0].mxu0
    %v1587 = vadd.f32 %v914, %v1586
    %v1588 = vpop.f32.mrb[0].mxu0
    %1589 = vdwg.mxu0
    %v1590 = vmax.f32 %v1336, 0.0
    %v1591 = vmax.f32 %v1339, 0.0
    %v1592 = vmax.f32 %v1344, 0.0
    %v1593 = vmax.f32 %v1347, 0.0
    %v1594 = vmax.f32 %v1352, 0.0
    %v1595 = vmax.f32 %v1355, 0.0
    %v1596 = vmax.f32 %v1360, 0.0
    %v1597 = vmax.f32 %v1363, 0.0
    %v1598 = vmax.f32 %v1368, 0.0
    %v1599 = vmax.f32 %v1371, 0.0
    %v1600 = vmax.f32 %v1376, 0.0
    %v1601 = vmax.f32 %v1379, 0.0
    %v1602 = vmax.f32 %v1384, 0.0
    %v1603 = vmax.f32 %v1387, 0.0
    %v1604 = vmax.f32 %v1392, 0.0
    %v1605 = vmax.f32 %v1395, 0.0
    %v1606 = vmax.f32 %v1400, 0.0
    %v1607 = vmax.f32 %v1403, 0.0
    %v1608 = vmax.f32 %v1408, 0.0
    %v1609 = vmax.f32 %v1411, 0.0
    %v1610 = vmax.f32 %v1416, 0.0
    %v1611 = vmax.f32 %v1419, 0.0
    %v1612 = vmax.f32 %v1424, 0.0
    %v1613 = vmax.f32 %v1427, 0.0
    %v1614 = vmax.f32 %v1432, 0.0
    %v1615 = vmax.f32 %v1435, 0.0
    %v1616 = vmax.f32 %v1440, 0.0
    %v1617 = vmax.f32 %v1443, 0.0
    %v1618 = vmax.f32 %v1448, 0.0
    %v1619 = vmax.f32 %v1451, 0.0
    %v1620 = vmax.f32 %v1456, 0.0
    %v1621 = vmax.f32 %v1459, 0.0
    %v1622 = vmax.f32 %v1464, 0.0
    %v1623 = vmax.f32 %v1467, 0.0
    %v1624 = vmax.f32 %v1472, 0.0
    %v1625 = vmax.f32 %v1475, 0.0
    %v1626 = vmax.f32 %v1480, 0.0
    %v1627 = vmax.f32 %v1483, 0.0
    %v1628 = vmax.f32 %v1488, 0.0
    %v1629 = vmax.f32 %v1491, 0.0
    %v1630 = vmax.f32 %v1496, 0.0
    %v1631 = vmax.f32 %v1499, 0.0
    %v1632 = vmax.f32 %v1504, 0.0
    %v1633 = vmax.f32 %v1507, 0.0
    %v1634 = vmax.f32 %v1512, 0.0
    %v1635 = vmax.f32 %v1515, 0.0
    %v1636 = vmax.f32 %v1520, 0.0
    %v1637 = vmax.f32 %v1523, 0.0
    %v1638 = vmax.f32 %v1528, 0.0
    %v1639 = vmax.f32 %v1531, 0.0
    %v1640 = vmax.f32 %v1536, 0.0
    %v1641 = vmax.f32 %v1539, 0.0
    %v1642 = vmax.f32 %v1544, 0.0
    %v1643 = vmax.f32 %v1547, 0.0
    %v1644 = vmax.f32 %v1552, 0.0
    %v1645 = vmax.f32 %v1555, 0.0
    %v1646 = vmax.f32 %v1560, 0.0
    %v1647 = vmax.f32 %v1563, 0.0
    %v1648 = vmax.f32 %v1568, 0.0
    %v1649 = vmax.f32 %v1571, 0.0
    %v1650 = vmax.f32 %v1576, 0.0
    %v1651 = vmax.f32 %v1579, 0.0
    %v1652 = vmax.f32 %v1584, 0.0
    %v1653 = vmax.f32 %v1587, 0.0
    %v1654 = vld [vmem:[%s5] sm:$0xff]
    %v1655 = vld [vmem:[%s5 + $0x8] sm:$0xff]
    %v1656 = vld [vmem:[%s5 + $0x10] sm:$0xff]
    %v1657 = vld [vmem:[%s5 + $0x18] sm:$0xff]
    %v1658 = vld [vmem:[%s5 + $0x20] sm:$0xff]
    %v1659 = vld [vmem:[%s5 + $0x28] sm:$0xff]
    %v1660 = vld [vmem:[%s5 + $0x30] sm:$0xff]
    %v1661 = vld [vmem:[%s5 + $0x38] sm:$0xff]
    %v1662 = vld [vmem:[%s5 + $0x40] sm:$0xff]
    %v1663 = vld [vmem:[%s5 + $0x48] sm:$0xff]
    %v1664 = vld [vmem:[%s5 + $0x50] sm:$0xff]
    %v1665 = vld [vmem:[%s5 + $0x58] sm:$0xff]
    %v1666 = vld [vmem:[%s5 + $0x60] sm:$0xff]
    %v1667 = vld [vmem:[%s5 + $0x68] sm:$0xff]
    %v1668 = vld [vmem:[%s5 + $0x70] sm:$0xff]
    %v1669 = vld [vmem:[%s5 + $0x78] sm:$0xff]
    %v1670 = vld [vmem:[%s5 + $0x80] sm:$0xff]
    %v1671 = vld [vmem:[%s5 + $0x88] sm:$0xff]
    %v1672 = vld [vmem:[%s5 + $0x90] sm:$0xff]
    %v1673 = vld [vmem:[%s5 + $0x98] sm:$0xff]
    %v1674 = vld [vmem:[%s5 + $0xa0] sm:$0xff]
    %v1675 = vld [vmem:[%s5 + $0xa8] sm:$0xff]
    %v1676 = vld [vmem:[%s5 + $0xb0] sm:$0xff]
    %v1677 = vld [vmem:[%s5 + $0xb8] sm:$0xff]
    %v1678 = vld [vmem:[%s5 + $0xc0] sm:$0xff]
    %v1679 = vld [vmem:[%s5 + $0xc8] sm:$0xff]
    %v1680 = vld [vmem:[%s5 + $0xd0] sm:$0xff]
    %v1681 = vld [vmem:[%s5 + $0xd8] sm:$0xff]
    %v1682 = vld [vmem:[%s5 + $0xe0] sm:$0xff]
    %v1683 = vld [vmem:[%s5 + $0xe8] sm:$0xff]
    %v1684 = vld [vmem:[%s5 + $0xf0] sm:$0xff]
    %v1685 = vld [vmem:[%s5 + $0xf8] sm:$0xff]
    %v1686 = vld [vmem:[%s5 + $0x100] sm:$0xff]
    %v1687 = vld [vmem:[%s5 + $0x108] sm:$0xff]
    %v1688 = vld [vmem:[%s5 + $0x110] sm:$0xff]
    %v1689 = vld [vmem:[%s5 + $0x118] sm:$0xff]
    %v1690 = vld [vmem:[%s5 + $0x120] sm:$0xff]
    %v1691 = vld [vmem:[%s5 + $0x128] sm:$0xff]
    %v1692 = vld [vmem:[%s5 + $0x130] sm:$0xff]
    %v1693 = vld [vmem:[%s5 + $0x138] sm:$0xff]
    %v1694 = vld [vmem:[%s5 + $0x140] sm:$0xff]
    %v1695 = vld [vmem:[%s5 + $0x148] sm:$0xff]
    %v1696 = vld [vmem:[%s5 + $0x150] sm:$0xff]
    %v1697 = vld [vmem:[%s5 + $0x158] sm:$0xff]
    %v1698 = vld [vmem:[%s5 + $0x160] sm:$0xff]
    %v1699 = vld [vmem:[%s5 + $0x168] sm:$0xff]
    %v1700 = vld [vmem:[%s5 + $0x170] sm:$0xff]
    %v1701 = vld [vmem:[%s5 + $0x178] sm:$0xff]
    %v1702 = vld [vmem:[%s5 + $0x180] sm:$0xff]
    %v1703 = vld [vmem:[%s5 + $0x188] sm:$0xff]
    %v1704 = vld [vmem:[%s5 + $0x190] sm:$0xff]
    %v1705 = vld [vmem:[%s5 + $0x198] sm:$0xff]
    %v1706 = vld [vmem:[%s5 + $0x1a0] sm:$0xff]
    %v1707 = vld [vmem:[%s5 + $0x1a8] sm:$0xff]
    %v1708 = vld [vmem:[%s5 + $0x1b0] sm:$0xff]
    %v1709 = vld [vmem:[%s5 + $0x1b8] sm:$0xff]
    %v1710 = vld [vmem:[%s5 + $0x1c0] sm:$0xff]
    %v1711 = vld [vmem:[%s5 + $0x1c8] sm:$0xff]
    %v1712 = vld [vmem:[%s5 + $0x1d0] sm:$0xff]
    %v1713 = vld [vmem:[%s5 + $0x1d8] sm:$0xff]
    %v1714 = vld [vmem:[%s5 + $0x1e0] sm:$0xff]
    %v1715 = vld [vmem:[%s5 + $0x1e8] sm:$0xff]
    %v1716 = vld [vmem:[%s5 + $0x1f0] sm:$0xff]
    %v1717 = vld [vmem:[%s5 + $0x1f8] sm:$0xff]
    %1719 = vset.pattern.permute.xlu0 0
    %1720 = vperm.xlu0 %1719, %v1654
    %v1721 = vpop.permute.xlu0 %1720
    %1724 = vset.pattern.permute.xlu0 0
    %1725 = vperm.xlu0 %1724, %v1655
    %v1726 = vpop.permute.xlu0 %1725
    %1729 = vset.pattern.permute.xlu0 0
    %1730 = vperm.xlu0 %1729, %v1656
    %v1731 = vpop.permute.xlu0 %1730
    %1734 = vset.pattern.permute.xlu0 0
    %1735 = vperm.xlu0 %1734, %v1657
    %v1736 = vpop.permute.xlu0 %1735
    %1739 = vset.pattern.permute.xlu0 0
    %1740 = vperm.xlu0 %1739, %v1658
    %v1741 = vpop.permute.xlu0 %1740
    %1744 = vset.pattern.permute.xlu0 0
    %1745 = vperm.xlu0 %1744, %v1659
    %v1746 = vpop.permute.xlu0 %1745
    %1749 = vset.pattern.permute.xlu0 0
    %1750 = vperm.xlu0 %1749, %v1660
    %v1751 = vpop.permute.xlu0 %1750
    %1754 = vset.pattern.permute.xlu0 0
    %1755 = vperm.xlu0 %1754, %v1661
    %v1756 = vpop.permute.xlu0 %1755
    %1759 = vset.pattern.permute.xlu0 0
    %1760 = vperm.xlu0 %1759, %v1662
    %v1761 = vpop.permute.xlu0 %1760
    %1764 = vset.pattern.permute.xlu0 0
    %1765 = vperm.xlu0 %1764, %v1663
    %v1766 = vpop.permute.xlu0 %1765
    %1769 = vset.pattern.permute.xlu0 0
    %1770 = vperm.xlu0 %1769, %v1664
    %v1771 = vpop.permute.xlu0 %1770
    %1774 = vset.pattern.permute.xlu0 0
    %1775 = vperm.xlu0 %1774, %v1665
    %v1776 = vpop.permute.xlu0 %1775
    %1779 = vset.pattern.permute.xlu0 0
    %1780 = vperm.xlu0 %1779, %v1666
    %v1781 = vpop.permute.xlu0 %1780
    %1784 = vset.pattern.permute.xlu0 0
    %1785 = vperm.xlu0 %1784, %v1667
    %v1786 = vpop.permute.xlu0 %1785
    %1789 = vset.pattern.permute.xlu0 0
    %1790 = vperm.xlu0 %1789, %v1668
    %v1791 = vpop.permute.xlu0 %1790
    %1794 = vset.pattern.permute.xlu0 0
    %1795 = vperm.xlu0 %1794, %v1669
    %v1796 = vpop.permute.xlu0 %1795
    %1799 = vset.pattern.permute.xlu0 0
    %1800 = vperm.xlu0 %1799, %v1670
    %v1801 = vpop.permute.xlu0 %1800
    %1804 = vset.pattern.permute.xlu0 0
    %1805 = vperm.xlu0 %1804, %v1671
    %v1806 = vpop.permute.xlu0 %1805
    %1809 = vset.pattern.permute.xlu0 0
    %1810 = vperm.xlu0 %1809, %v1672
    %v1811 = vpop.permute.xlu0 %1810
    %1814 = vset.pattern.permute.xlu0 0
    %1815 = vperm.xlu0 %1814, %v1673
    %v1816 = vpop.permute.xlu0 %1815
    %1819 = vset.pattern.permute.xlu0 0
    %1820 = vperm.xlu0 %1819, %v1674
    %v1821 = vpop.permute.xlu0 %1820
    %1824 = vset.pattern.permute.xlu0 0
    %1825 = vperm.xlu0 %1824, %v1675
    %v1826 = vpop.permute.xlu0 %1825
    %1829 = vset.pattern.permute.xlu0 0
    %1830 = vperm.xlu0 %1829, %v1676
    %v1831 = vpop.permute.xlu0 %1830
    %1834 = vset.pattern.permute.xlu0 0
    %1835 = vperm.xlu0 %1834, %v1677
    %v1836 = vpop.permute.xlu0 %1835
    %1839 = vset.pattern.permute.xlu0 0
    %1840 = vperm.xlu0 %1839, %v1678
    %v1841 = vpop.permute.xlu0 %1840
    %1844 = vset.pattern.permute.xlu0 0
    %1845 = vperm.xlu0 %1844, %v1679
    %v1846 = vpop.permute.xlu0 %1845
    %1849 = vset.pattern.permute.xlu0 0
    %1850 = vperm.xlu0 %1849, %v1680
    %v1851 = vpop.permute.xlu0 %1850
    %1854 = vset.pattern.permute.xlu0 0
    %1855 = vperm.xlu0 %1854, %v1681
    %v1856 = vpop.permute.xlu0 %1855
    %1859 = vset.pattern.permute.xlu0 0
    %1860 = vperm.xlu0 %1859, %v1682
    %v1861 = vpop.permute.xlu0 %1860
    %1864 = vset.pattern.permute.xlu0 0
    %1865 = vperm.xlu0 %1864, %v1683
    %v1866 = vpop.permute.xlu0 %1865
    %1869 = vset.pattern.permute.xlu0 0
    %1870 = vperm.xlu0 %1869, %v1684
    %v1871 = vpop.permute.xlu0 %1870
    %1874 = vset.pattern.permute.xlu0 0
    %1875 = vperm.xlu0 %1874, %v1685
    %v1876 = vpop.permute.xlu0 %1875
    %1879 = vset.pattern.permute.xlu0 0
    %1880 = vperm.xlu0 %1879, %v1686
    %v1881 = vpop.permute.xlu0 %1880
    %1884 = vset.pattern.permute.xlu0 0
    %1885 = vperm.xlu0 %1884, %v1687
    %v1886 = vpop.permute.xlu0 %1885
    %1889 = vset.pattern.permute.xlu0 0
    %1890 = vperm.xlu0 %1889, %v1688
    %v1891 = vpop.permute.xlu0 %1890
    %1894 = vset.pattern.permute.xlu0 0
    %1895 = vperm.xlu0 %1894, %v1689
    %v1896 = vpop.permute.xlu0 %1895
    %1899 = vset.pattern.permute.xlu0 0
    %1900 = vperm.xlu0 %1899, %v1690
    %v1901 = vpop.permute.xlu0 %1900
    %1904 = vset.pattern.permute.xlu0 0
    %1905 = vperm.xlu0 %1904, %v1691
    %v1906 = vpop.permute.xlu0 %1905
    %1909 = vset.pattern.permute.xlu0 0
    %1910 = vperm.xlu0 %1909, %v1692
    %v1911 = vpop.permute.xlu0 %1910
    %1914 = vset.pattern.permute.xlu0 0
    %1915 = vperm.xlu0 %1914, %v1693
    %v1916 = vpop.permute.xlu0 %1915
    %1919 = vset.pattern.permute.xlu0 0
    %1920 = vperm.xlu0 %1919, %v1694
    %v1921 = vpop.permute.xlu0 %1920
    %1924 = vset.pattern.permute.xlu0 0
    %1925 = vperm.xlu0 %1924, %v1695
    %v1926 = vpop.permute.xlu0 %1925
    %1929 = vset.pattern.permute.xlu0 0
    %1930 = vperm.xlu0 %1929, %v1696
    %v1931 = vpop.permute.xlu0 %1930
    %1934 = vset.pattern.permute.xlu0 0
    %1935 = vperm.xlu0 %1934, %v1697
    %v1936 = vpop.permute.xlu0 %1935
    %1939 = vset.pattern.permute.xlu0 0
    %1940 = vperm.xlu0 %1939, %v1698
    %v1941 = vpop.permute.xlu0 %1940
    %1944 = vset.pattern.permute.xlu0 0
    %1945 = vperm.xlu0 %1944, %v1699
    %v1946 = vpop.permute.xlu0 %1945
    %1949 = vset.pattern.permute.xlu0 0
    %1950 = vperm.xlu0 %1949, %v1700
    %v1951 = vpop.permute.xlu0 %1950
    %1954 = vset.pattern.permute.xlu0 0
    %1955 = vperm.xlu0 %1954, %v1701
    %v1956 = vpop.permute.xlu0 %1955
    %1959 = vset.pattern.permute.xlu0 0
    %1960 = vperm.xlu0 %1959, %v1702
    %v1961 = vpop.permute.xlu0 %1960
    %1964 = vset.pattern.permute.xlu0 0
    %1965 = vperm.xlu0 %1964, %v1703
    %v1966 = vpop.permute.xlu0 %1965
    %1969 = vset.pattern.permute.xlu0 0
    %1970 = vperm.xlu0 %1969, %v1704
    %v1971 = vpop.permute.xlu0 %1970
    %1974 = vset.pattern.permute.xlu0 0
    %1975 = vperm.xlu0 %1974, %v1705
    %v1976 = vpop.permute.xlu0 %1975
    %1979 = vset.pattern.permute.xlu0 0
    %1980 = vperm.xlu0 %1979, %v1706
    %v1981 = vpop.permute.xlu0 %1980
    %1984 = vset.pattern.permute.xlu0 0
    %1985 = vperm.xlu0 %1984, %v1707
    %v1986 = vpop.permute.xlu0 %1985
    %1989 = vset.pattern.permute.xlu0 0
    %1990 = vperm.xlu0 %1989, %v1708
    %v1991 = vpop.permute.xlu0 %1990
    %1994 = vset.pattern.permute.xlu0 0
    %1995 = vperm.xlu0 %1994, %v1709
    %v1996 = vpop.permute.xlu0 %1995
    %1999 = vset.pattern.permute.xlu0 0
    %2000 = vperm.xlu0 %1999, %v1710
    %v2001 = vpop.permute.xlu0 %2000
    %2004 = vset.pattern.permute.xlu0 0
    %2005 = vperm.xlu0 %2004, %v1711
    %v2006 = vpop.permute.xlu0 %2005
    %2009 = vset.pattern.permute.xlu0 0
    %2010 = vperm.xlu0 %2009, %v1712
    %v2011 = vpop.permute.xlu0 %2010
    %2014 = vset.pattern.permute.xlu0 0
    %2015 = vperm.xlu0 %2014, %v1713
    %v2016 = vpop.permute.xlu0 %2015
    %2019 = vset.pattern.permute.xlu0 0
    %2020 = vperm.xlu0 %2019, %v1714
    %v2021 = vpop.permute.xlu0 %2020
    %2024 = vset.pattern.permute.xlu0 0
    %2025 = vperm.xlu0 %2024, %v1715
    %v2026 = vpop.permute.xlu0 %2025
    %2029 = vset.pattern.permute.xlu0 0
    %2030 = vperm.xlu0 %2029, %v1716
    %v2031 = vpop.permute.xlu0 %2030
    %2034 = vset.pattern.permute.xlu0 0
    %2035 = vperm.xlu0 %2034, %v1717
    %v2036 = vpop.permute.xlu0 %2035
    %v2038 = vmul.f32 %v1590, %v1721
    %v2039 = vmul.f32 %v1591, %v1726
    %v2040 = vmul.f32 %v1592, %v1731
    %v2041 = vmul.f32 %v1593, %v1736
    %v2042 = vmul.f32 %v1594, %v1741
    %v2043 = vmul.f32 %v1595, %v1746
    %v2044 = vmul.f32 %v1596, %v1751
    %v2045 = vmul.f32 %v1597, %v1756
    %v2046 = vmul.f32 %v1598, %v1761
    %v2047 = vmul.f32 %v1599, %v1766
    %v2048 = vmul.f32 %v1600, %v1771
    %v2049 = vmul.f32 %v1601, %v1776
    %v2050 = vmul.f32 %v1602, %v1781
    %v2051 = vmul.f32 %v1603, %v1786
    %v2052 = vmul.f32 %v1604, %v1791
    %v2053 = vmul.f32 %v1605, %v1796
    %v2054 = vmul.f32 %v1606, %v1801
    %v2055 = vmul.f32 %v1607, %v1806
    %v2056 = vmul.f32 %v1608, %v1811
    %v2057 = vmul.f32 %v1609, %v1816
    %v2058 = vmul.f32 %v1610, %v1821
    %v2059 = vmul.f32 %v1611, %v1826
    %v2060 = vmul.f32 %v1612, %v1831
    %v2061 = vmul.f32 %v1613, %v1836
    %v2062 = vmul.f32 %v1614, %v1841
    %v2063 = vmul.f32 %v1615, %v1846
    %v2064 = vmul.f32 %v1616, %v1851
    %v2065 = vmul.f32 %v1617, %v1856
    %v2066 = vmul.f32 %v1618, %v1861
    %v2067 = vmul.f32 %v1619, %v1866
    %v2068 = vmul.f32 %v1620, %v1871
    %v2069 = vmul.f32 %v1621, %v1876
    %v2070 = vmul.f32 %v1622, %v1881
    %v2071 = vmul.f32 %v1623, %v1886
    %v2072 = vmul.f32 %v1624, %v1891
    %v2073 = vmul.f32 %v1625, %v1896
    %v2074 = vmul.f32 %v1626, %v1901
    %v2075 = vmul.f32 %v1627, %v1906
    %v2076 = vmul.f32 %v1628, %v1911
    %v2077 = vmul.f32 %v1629, %v1916
    %v2078 = vmul.f32 %v1630, %v1921
    %v2079 = vmul.f32 %v1631, %v1926
    %v2080 = vmul.f32 %v1632, %v1931
    %v2081 = vmul.f32 %v1633, %v1936
    %v2082 = vmul.f32 %v1634, %v1941
    %v2083 = vmul.f32 %v1635, %v1946
    %v2084 = vmul.f32 %v1636, %v1951
    %v2085 = vmul.f32 %v1637, %v1956
    %v2086 = vmul.f32 %v1638, %v1961
    %v2087 = vmul.f32 %v1639, %v1966
    %v2088 = vmul.f32 %v1640, %v1971
    %v2089 = vmul.f32 %v1641, %v1976
    %v2090 = vmul.f32 %v1642, %v1981
    %v2091 = vmul.f32 %v1643, %v1986
    %v2092 = vmul.f32 %v1644, %v1991
    %v2093 = vmul.f32 %v1645, %v1996
    %v2094 = vmul.f32 %v1646, %v2001
    %v2095 = vmul.f32 %v1647, %v2006
    %v2096 = vmul.f32 %v1648, %v2011
    %v2097 = vmul.f32 %v1649, %v2016
    %v2098 = vmul.f32 %v1650, %v2021
    %v2099 = vmul.f32 %v1651, %v2026
    %v2100 = vmul.f32 %v1652, %v2031
    %v2101 = vmul.f32 %v1653, %v2036
    %vm2102 = vcmask 15360
    %v2103 = vsel %vm2102, %v2038, 0.0
    %v2104 = vsel %vm2102, %v2039, 0.0
    %v2105 = vadd.f32 %v2103, %v2104
    %v2106 = vsel %vm2102, %v2040, 0.0
    %v2107 = vadd.f32 %v2105, %v2106
    %v2108 = vsel %vm2102, %v2041, 0.0
    %v2109 = vadd.f32 %v2107, %v2108
    %v2110 = vsel %vm2102, %v2042, 0.0
    %v2111 = vadd.f32 %v2109, %v2110
    %v2112 = vsel %vm2102, %v2043, 0.0
    %v2113 = vadd.f32 %v2111, %v2112
    %v2114 = vsel %vm2102, %v2044, 0.0
    %v2115 = vadd.f32 %v2113, %v2114
    %v2116 = vsel %vm2102, %v2045, 0.0
    %v2117 = vadd.f32 %v2115, %v2116
    %v2118 = vsel %vm2102, %v2046, 0.0
    %v2119 = vadd.f32 %v2117, %v2118
    %v2120 = vsel %vm2102, %v2047, 0.0
    %v2121 = vadd.f32 %v2119, %v2120
    %v2122 = vsel %vm2102, %v2048, 0.0
    %v2123 = vadd.f32 %v2121, %v2122
    %v2124 = vsel %vm2102, %v2049, 0.0
    %v2125 = vadd.f32 %v2123, %v2124
    %v2126 = vsel %vm2102, %v2050, 0.0
    %v2127 = vadd.f32 %v2125, %v2126
    %v2128 = vsel %vm2102, %v2051, 0.0
    %v2129 = vadd.f32 %v2127, %v2128
    %v2130 = vsel %vm2102, %v2052, 0.0
    %v2131 = vadd.f32 %v2129, %v2130
    %v2132 = vsel %vm2102, %v2053, 0.0
    %v2133 = vadd.f32 %v2131, %v2132
    %v2134 = vsel %vm2102, %v2054, 0.0
    %v2135 = vadd.f32 %v2133, %v2134
    %v2136 = vsel %vm2102, %v2055, 0.0
    %v2137 = vadd.f32 %v2135, %v2136
    %v2138 = vsel %vm2102, %v2056, 0.0
    %v2139 = vadd.f32 %v2137, %v2138
    %v2140 = vsel %vm2102, %v2057, 0.0
    %v2141 = vadd.f32 %v2139, %v2140
    %v2142 = vsel %vm2102, %v2058, 0.0
    %v2143 = vadd.f32 %v2141, %v2142
    %v2144 = vsel %vm2102, %v2059, 0.0
    %v2145 = vadd.f32 %v2143, %v2144
    %v2146 = vsel %vm2102, %v2060, 0.0
    %v2147 = vadd.f32 %v2145, %v2146
    %v2148 = vsel %vm2102, %v2061, 0.0
    %v2149 = vadd.f32 %v2147, %v2148
    %v2150 = vsel %vm2102, %v2062, 0.0
    %v2151 = vadd.f32 %v2149, %v2150
    %v2152 = vsel %vm2102, %v2063, 0.0
    %v2153 = vadd.f32 %v2151, %v2152
    %v2154 = vsel %vm2102, %v2064, 0.0
    %v2155 = vadd.f32 %v2153, %v2154
    %v2156 = vsel %vm2102, %v2065, 0.0
    %v2157 = vadd.f32 %v2155, %v2156
    %v2158 = vsel %vm2102, %v2066, 0.0
    %v2159 = vadd.f32 %v2157, %v2158
    %v2160 = vsel %vm2102, %v2067, 0.0
    %v2161 = vadd.f32 %v2159, %v2160
    %v2162 = vsel %vm2102, %v2068, 0.0
    %v2163 = vadd.f32 %v2161, %v2162
    %v2164 = vsel %vm2102, %v2069, 0.0
    %v2165 = vadd.f32 %v2163, %v2164
    %v2166 = vsel %vm2102, %v2070, 0.0
    %v2167 = vadd.f32 %v2165, %v2166
    %v2168 = vsel %vm2102, %v2071, 0.0
    %v2169 = vadd.f32 %v2167, %v2168
    %v2170 = vsel %vm2102, %v2072, 0.0
    %v2171 = vadd.f32 %v2169, %v2170
    %v2172 = vsel %vm2102, %v2073, 0.0
    %v2173 = vadd.f32 %v2171, %v2172
    %v2174 = vsel %vm2102, %v2074, 0.0
    %v2175 = vadd.f32 %v2173, %v2174
    %v2176 = vsel %vm2102, %v2075, 0.0
    %v2177 = vadd.f32 %v2175, %v2176
    %v2178 = vsel %vm2102, %v2076, 0.0
    %v2179 = vadd.f32 %v2177, %v2178
    %v2180 = vsel %vm2102, %v2077, 0.0
    %v2181 = vadd.f32 %v2179, %v2180
    %v2182 = vsel %vm2102, %v2078, 0.0
    %v2183 = vadd.f32 %v2181, %v2182
    %v2184 = vsel %vm2102, %v2079, 0.0
    %v2185 = vadd.f32 %v2183, %v2184
    %v2186 = vsel %vm2102, %v2080, 0.0
    %v2187 = vadd.f32 %v2185, %v2186
    %v2188 = vsel %vm2102, %v2081, 0.0
    %v2189 = vadd.f32 %v2187, %v2188
    %v2190 = vsel %vm2102, %v2082, 0.0
    %v2191 = vadd.f32 %v2189, %v2190
    %v2192 = vsel %vm2102, %v2083, 0.0
    %v2193 = vadd.f32 %v2191, %v2192
    %v2194 = vsel %vm2102, %v2084, 0.0
    %v2195 = vadd.f32 %v2193, %v2194
    %v2196 = vsel %vm2102, %v2085, 0.0
    %v2197 = vadd.f32 %v2195, %v2196
    %v2198 = vsel %vm2102, %v2086, 0.0
    %v2199 = vadd.f32 %v2197, %v2198
    %v2200 = vsel %vm2102, %v2087, 0.0
    %v2201 = vadd.f32 %v2199, %v2200
    %v2202 = vsel %vm2102, %v2088, 0.0
    %v2203 = vadd.f32 %v2201, %v2202
    %v2204 = vsel %vm2102, %v2089, 0.0
    %v2205 = vadd.f32 %v2203, %v2204
    %v2206 = vsel %vm2102, %v2090, 0.0
    %v2207 = vadd.f32 %v2205, %v2206
    %v2208 = vsel %vm2102, %v2091, 0.0
    %v2209 = vadd.f32 %v2207, %v2208
    %v2210 = vsel %vm2102, %v2092, 0.0
    %v2211 = vadd.f32 %v2209, %v2210
    %v2212 = vsel %vm2102, %v2093, 0.0
    %v2213 = vadd.f32 %v2211, %v2212
    %v2214 = vsel %vm2102, %v2094, 0.0
    %v2215 = vadd.f32 %v2213, %v2214
    %v2216 = vsel %vm2102, %v2095, 0.0
    %v2217 = vadd.f32 %v2215, %v2216
    %v2218 = vsel %vm2102, %v2096, 0.0
    %v2219 = vadd.f32 %v2217, %v2218
    %v2220 = vsel %vm2102, %v2097, 0.0
    %v2221 = vadd.f32 %v2219, %v2220
    %v2222 = vsel %vm2102, %v2098, 0.0
    %v2223 = vadd.f32 %v2221, %v2222
    %v2224 = vsel %vm2102, %v2099, 0.0
    %v2225 = vadd.f32 %v2223, %v2224
    %v2226 = vsel %vm2102, %v2100, 0.0
    %v2227 = vadd.f32 %v2225, %v2226
    %v2228 = vsel %vm2102, %v2101, 0.0
    %v2229 = vadd.f32 %v2227, %v2228
    %v2230 = vrot.slane %v2229, 4
    %v2231 = vadd.f32 %v2229, %v2230
    %v2232 = vrot.slane %v2231, 2
    %v2233 = vadd.f32 %v2231, %v2232
    %v2234 = vrot.slane %v2233, 1
    %v2235 = vadd.f32 %v2233, %v2234
    %v2236 = vld [vmem:[#allocation2] sm:$0x1]
    %2238 = vset.pattern.permute.xlu0 0
    %2239 = vperm.xlu0 %2238, %v2236
    %v2240 = vpop.permute.xlu0 %2239
    %v2242 = vlaneseq
    %v2243 = vshrl.u32 %v2242, 7
    %v2244 = vsub.s32 0, %v2243
    %v2245 = vrot.slane %v2240, %v2244
    %v2246 = vadd.f32 %v2235, %v2245
    %vm2247 = vcmask 8192
    %2248 = vst.msk [vmem:[#allocation3] sm:$0x1] %vm2247, %v2246
    // Predicated region
    $region30: #{tpu_custom_call.1} parent=1 // pred_check
      _
    $region31: #{tpu_custom_call.1} parent=1 // pred_check_branch
      %2250 = sbr.rel (0) target = $region33
    $region32: #{tpu_custom_call.1} parent=1 // pred_region
      %s2252 = ssub.s32 16, 16
      %2253 = vsyncadd [#allocation4], %s2252
      %s2255 = sshll.u32 [#allocation3], 4
      %s2256 = int_to_ptr.vmem [resolvable:$true] %s2255
      %2258 = dma.vmem_to_hbm [thread:$0]  %s2256, 16, %s7, [#allocation4]
    $region33: #{tpu_custom_call.1} parent=1 // pred_fallthru
      _
    // Predicated region
    $region34: #{tpu_custom_call.1} parent=1 // pred_check
      _
    $region35: #{tpu_custom_call.1} parent=1 // pred_check_branch
      %2260 = sbr.rel (0) target = $region37
    $region36: #{tpu_custom_call.1} parent=1 // pred_region
      %2261 = dma.done [#allocation4], 16
    $region37: #{tpu_custom_call.1} parent=1 // pred_fallthru
      _
    %2262 = vsyncpa [#allocation4], 1

</llo_original>
